<compile_context>
chip_gen: v7x
topology: tpu7x:2x2x1
jax: 0.10.0
libtpu: 0.0.40
codegen_flags: <defaults>
</compile_context>

<pallas_src>
import math
import functools

import jax
import jax.numpy as jnp
from jax import lax
from jax.experimental import pallas as pl
from jax.experimental.pallas import tpu as pltpu


def _cross_attention_kernel(
    f0_ref, f1_ref,            # (N, D) f32 activations (one batch per step)
    wq_ref, bq_ref,            # (D, D) compute_dtype, (1, D) f32
    wkv_ref, bkv_ref,          # (D, 2D) compute_dtype, (1, 2D) f32
    wo_ref, bo_ref,            # (H, Dh, D) compute_dtype, (1, D) f32
    gamma_ref, beta_ref,       # (1, D) f32
    out_ref,                   # (N, D)
    *, seq_len, dim, num_heads, head_dim, ln_eps,
    compute_dtype, approx_recip, fold_wo_into_v,
):
    N, D, H, Dh = seq_len, dim, num_heads, head_dim

    # Keep an f32 copy of f0 for the residual.
    x0 = f0_ref[...]                               # (N, D) f32
    x1 = f1_ref[...]
    x0c = x0.astype(compute_dtype)
    x1c = x1.astype(compute_dtype)

    # --- projections (MXU, f32 accumulate); K/V fused into one matmul ------
    q = jnp.dot(x0c, wq_ref[...], preferred_element_type=jnp.float32) + bq_ref[...]
    kv = jnp.dot(x1c, wkv_ref[...], preferred_element_type=jnp.float32) + bkv_ref[...]

    # Scale folded into q (cheaper than scaling the (N, N) score tile).
    scale = 1.0 / math.sqrt(Dh)
    qc = (q * scale).astype(compute_dtype)
    kc = kv[:, :D].astype(compute_dtype)
    vc = kv[:, D:].astype(compute_dtype)

    # Hoisted, q-independent per-head V'_h = V_h @ Wo[h] (fold path only).
    # These sit off the softmax-dependent critical path.
    if fold_wo_into_v:
        v_fold = [
            jnp.dot(vc[:, h * Dh:(h + 1) * Dh], wo_ref[h],
                    preferred_element_type=jnp.float32).astype(compute_dtype)
            for h in range(H)
        ]

    # --- per-head attention; heads fully unrolled (H is small) -------------
    o_acc = jnp.zeros((N, D), jnp.float32)         # full-width accumulator
    for h in range(H):
        c0, c1 = h * Dh, (h + 1) * Dh
        qh = qc[:, c0:c1]                          # (N, Dh)
        kh = kc[:, c0:c1]

        # scores = qh @ kh^T without an explicit transpose (NT matmul).
        s = lax.dot_general(qh, kh, (((1,), (1,)), ((), ())),
                            preferred_element_type=jnp.float32)   # (N, N)
        s = s - jnp.max(s, axis=-1, keepdims=True)
        p = jnp.exp(s)                                             # f32 (EUP)
        # Deferred normalization: scale the matmul result, not the (N, N) tile.
        inv_l = pl.reciprocal(jnp.sum(p, axis=-1, keepdims=True),
                              approx=approx_recip)                 # (N, 1)
        # dropout(attn) -> identity (eval mode).
        pc = p.astype(compute_dtype)

        if fold_wo_into_v:
            # sum_h softmax_h @ (V_h @ Wo[h])  ==  concat_h(ctx_h) @ Wo
            part = jnp.dot(pc, v_fold[h],
                           preferred_element_type=jnp.float32)     # (N, D)
            o_acc = o_acc + part * inv_l
        else:
            ctx = jnp.dot(pc, vc[:, c0:c1],
                          preferred_element_type=jnp.float32)      # (N, Dh)
            ctx = (ctx * inv_l).astype(compute_dtype)
            o_acc = o_acc + jnp.dot(ctx, wo_ref[h],
                                    preferred_element_type=jnp.float32)

    # --- residual + LayerNorm (all f32 elementwise math) --------------------
    x = x0 + o_acc + bo_ref[...]
    mu = jnp.mean(x, axis=-1, keepdims=True)
    xc = x - mu
    var = jnp.mean(xc * xc, axis=-1, keepdims=True)
    y = xc * lax.rsqrt(var + ln_eps)
    out_ref[...] = (y * gamma_ref[...] + beta_ref[...]).astype(out_ref.dtype)


def _default_fold_wo_into_v():
    """True on 256-wide-MXU chips (v6e/v7x), False on 128-wide (<= v5)."""
    try:
        kind = jax.devices()[0].device_kind.lower()
    except Exception:
        return True
    return not any(tag in kind for tag in ("v2", "v3", "v4", "v5"))


def prepare_cross_attention_params(params, *, num_heads,
                                   compute_dtype=jnp.bfloat16):
    """One-time parameter prep (do NOT redo per forward call):
    fuse K/V weights, reshape Wo head-major, cast MXU operands."""
    wq, bq, wk, bk, wv, bv, wo, bo, gamma, beta = params
    D = wq.shape[0]
    assert D % num_heads == 0
    Dh = D // num_heads
    wkv = jnp.concatenate([wk, wv], axis=1).astype(compute_dtype)   # (D, 2D)
    bkv = jnp.concatenate([bk, bv], axis=1)                         # (1, 2D)
    wo_h = wo.reshape(num_heads, Dh, D).astype(compute_dtype)       # (H, Dh, D)
    return (wq.astype(compute_dtype), bq, wkv, bkv, wo_h, bo, gamma, beta)


def cross_attention(f0, f1, prepared_params, *, num_heads,
                    compute_dtype=jnp.bfloat16, fold_wo_into_v=None,
                    ln_eps=1e-5):
    """Fused cross-attention forward (eval mode), matching CrossAttentionModule.

    `prepared_params` must come from prepare_cross_attention_params with the
    same compute_dtype."""
    B, N, D = f0.shape
    assert D % num_heads == 0
    Dh = D // num_heads
    assert (N % 8 == 0) or (B == 1), "block rows must be sublane-aligned"
    wq_c, bq, wkv_c, bkv, wo_c, bo, gamma, beta = prepared_params

    if fold_wo_into_v is None:
        fold_wo_into_v = _default_fold_wo_into_v()

    # Fold batch into the matmul M dim (free metadata reshape); one batch per
    # grid step -> pipelined DMA overlap + work for both v7x TensorCores.
    f0_2d = f0.reshape(B * N, D)
    f1_2d = f1.reshape(B * N, D)

    approx_recip = bool(jnp.dtype(compute_dtype) != jnp.dtype(jnp.float32))

    kernel = functools.partial(
        _cross_attention_kernel,
        seq_len=N, dim=D, num_heads=num_heads, head_dim=Dh, ln_eps=ln_eps,
        compute_dtype=compute_dtype, approx_recip=approx_recip,
        fold_wo_into_v=fold_wo_into_v,
    )

    act_spec = pl.BlockSpec((N, D), lambda i: (i, 0))

    def bcast_spec(shape):
        zeros = (0,) * len(shape)
        return pl.BlockSpec(shape, lambda i: zeros)

    # --- explicit VMEM budget (review item: v7x has 64 MiB, 32 MiB scoped) ---
    wbytes = jnp.dtype(compute_dtype).itemsize
    act_bytes = N * D * 4
    weight_bytes = 4 * D * D * wbytes + 6 * D * 4
    interm_bytes = 10 * N * D * 4 + 2 * N * N * 4        # q/kv/casts + live scores
    vmem_est = 2 * 3 * act_bytes + 2 * weight_bytes + interm_bytes
    try:
        vmem_cap = pltpu.get_tpu_info().vmem_capacity_bytes
    except Exception:
        vmem_cap = 64 << 20                               # conservative (v7x)
    vmem_limit = int(min(max(vmem_est * 5 // 4, 32 << 20), vmem_cap * 3 // 4))

    cost = pl.CostEstimate(
        flops=int(8 * B * N * D * D + 4 * B * N * N * D),
        transcendentals=int(B * num_heads * N * N + 2 * B * N),
        bytes_accessed=int(3 * B * N * D * 4 + 4 * D * D * wbytes + 6 * D * 4),
    )

    out2d = pl.pallas_call(
        kernel,
        out_shape=jax.ShapeDtypeStruct((B * N, D), f0.dtype),
        grid_spec=pltpu.PrefetchScalarGridSpec(
            num_scalar_prefetch=0,
            grid=(B,),
            in_specs=[
                act_spec, act_spec,                              # f0, f1
                bcast_spec((D, D)), bcast_spec((1, D)),          # Wq, bq
                bcast_spec((D, 2 * D)), bcast_spec((1, 2 * D)),  # Wkv, bkv
                bcast_spec((num_heads, Dh, D)), bcast_spec((1, D)),  # Wo, bo
                bcast_spec((1, D)), bcast_spec((1, D)),          # gamma, beta
            ],
            out_specs=act_spec,
        ),
        compiler_params=pltpu.CompilerParams(
            dimension_semantics=("parallel",),
            vmem_limit_bytes=vmem_limit,
        ),
        cost_estimate=cost,
    )(f0_2d, f1_2d, wq_c, bq, wkv_c, bkv, wo_c, bo, gamma, beta)

    return out2d.reshape(B, N, D)


def reference_cross_attention(f0, f1, params, *, num_heads):
    """Pure-JAX reference mirroring the PyTorch forward (eval mode)."""
    wq, bq, wk, bk, wv, bv, wo, bo, gamma, beta = params
    B, N, D = f0.shape
    Dh = D // num_heads

    q = f0 @ wq + bq
    k = f1 @ wk + bk
    v = f1 @ wv + bv

    def split(x):  # b n (h d) -> b h n d
        return x.reshape(B, N, num_heads, Dh).transpose(0, 2, 1, 3)

    qh, kh, vh = split(q), split(k), split(v)
    scores = jnp.einsum('bhnd,bhmd->bhnm', qh, kh) / math.sqrt(Dh)
    attn = jax.nn.softmax(scores, axis=-1)
    out = jnp.einsum('bhnm,bhmd->bhnd', attn, vh)
    out = out.transpose(0, 2, 1, 3).reshape(B, N, D)
    out = out @ wo + bo
    x = f0 + out
    mu = jnp.mean(x, axis=-1, keepdims=True)
    var = jnp.mean((x - mu) ** 2, axis=-1, keepdims=True)
    return (x - mu) / jnp.sqrt(var + 1e-5) * gamma + beta


if __name__ == "__main__":
    # Small shapes consistent with the module (dim divisible by num_heads).
    B, N, D, H = 2, 16, 32, 4

    key = jax.random.PRNGKey(0)
    keys = jax.random.split(key, 10)

    f0 = jax.random.normal(keys[0], (B, N, D), dtype=jnp.float32)
    f1 = jax.random.normal(keys[1], (B, N, D), dtype=jnp.float32)

    # Deterministic synthetic parameters in (D_in, D_out) layout.
    scale = 1.0 / math.sqrt(D)
    wq = jax.random.normal(keys[2], (D, D), dtype=jnp.float32) * scale
    wk = jax.random.normal(keys[3], (D, D), dtype=jnp.float32) * scale
    wv = jax.random.normal(keys[4], (D, D), dtype=jnp.float32) * scale
    wo = jax.random.normal(keys[5], (D, D), dtype=jnp.float32) * scale
    bq = jax.random.normal(keys[6], (1, D), dtype=jnp.float32) * 0.01
    bk = jax.random.normal(keys[7], (1, D), dtype=jnp.float32) * 0.01
    bv = jax.random.normal(keys[8], (1, D), dtype=jnp.float32) * 0.01
    bo = jax.random.normal(keys[9], (1, D), dtype=jnp.float32) * 0.01
    gamma = jnp.ones((1, D), dtype=jnp.float32)
    beta = jnp.zeros((1, D), dtype=jnp.float32)

    params = (wq, bq, wk, bk, wv, bv, wo, bo, gamma, beta)
    ref = reference_cross_attention(f0, f1, params, num_heads=H)

    # One-time parameter prep (kept out of the per-call hot path).
    prep_f32 = prepare_cross_attention_params(
        params, num_heads=H, compute_dtype=jnp.float32)
    prep_bf16 = prepare_cross_attention_params(
        params, num_heads=H, compute_dtype=jnp.bfloat16)

    # 1) Exact path, both per-head formulations (Wo-fold is an exact rewrite).
    for fold in (False, True):
        out_f32 = jax.block_until_ready(
            cross_attention(f0, f1, prep_f32, num_heads=H,
                            compute_dtype=jnp.float32, fold_wo_into_v=fold))
        assert out_f32.shape == (B, N, D)
        err32 = jnp.max(jnp.abs(out_f32 - ref))
        assert jnp.allclose(out_f32, ref, atol=1e-4, rtol=1e-4), \
            f"f32 (fold={fold}) max err {err32}"

    # 2) Performance path: bf16 MXU operands + f32 accumulate + approximate
    #    EUP reciprocal; per-head form auto-gated by TPU generation.
    out_bf16 = jax.block_until_ready(
        cross_attention(f0, f1, prep_bf16, num_heads=H,
                        compute_dtype=jnp.bfloat16))
    assert out_bf16.shape == (B, N, D)
    err16 = jnp.max(jnp.abs(out_bf16 - ref))
    assert jnp.allclose(out_bf16, ref, atol=1e-1, rtol=1e-1), \
        f"bf16 max err {err16}"

    print("KERNEL_OK")
</pallas_src>

<mosaic_0001>
module attributes {stable_mosaic.version = 11 : i64} {
  func.func @_cross_attention_kernel(%arg0: i32, %arg1: memref<16x32xf32, #tpu.memory_space<vmem>>, %arg2: memref<16x32xf32, #tpu.memory_space<vmem>>, %arg3: memref<32x32xf32, #tpu.memory_space<vmem>>, %arg4: memref<1x32xf32, #tpu.memory_space<vmem>>, %arg5: memref<32x64xf32, #tpu.memory_space<vmem>>, %arg6: memref<1x64xf32, #tpu.memory_space<vmem>>, %arg7: memref<4x8x32xf32, #tpu.memory_space<vmem>>, %arg8: memref<1x32xf32, #tpu.memory_space<vmem>>, %arg9: memref<1x32xf32, #tpu.memory_space<vmem>>, %arg10: memref<1x32xf32, #tpu.memory_space<vmem>>, %arg11: memref<16x32xf32, #tpu.memory_space<vmem>>) attributes {dimension_semantics = [#tpu.dimension_semantics<parallel>], iteration_bounds = array<i64: 2>, scalar_prefetch = 0 : i64, scratch_operands = 0 : i64, tpu.core_type = #tpu.core_type<tc>, window_params = [{transform_indices = @transform_0, window_bounds = array<i64: 16, 32>}, {transform_indices = @transform_1, window_bounds = array<i64: 16, 32>}, {pipeline_mode = #tpu.pipeline_mode<synchronous>, transform_indices = @transform_2, window_bounds = array<i64: 32, 32>}, {pipeline_mode = #tpu.pipeline_mode<synchronous>, transform_indices = @transform_3, window_bounds = array<i64: 1, 32>}, {pipeline_mode = #tpu.pipeline_mode<synchronous>, transform_indices = @transform_4, window_bounds = array<i64: 32, 64>}, {pipeline_mode = #tpu.pipeline_mode<synchronous>, transform_indices = @transform_5, window_bounds = array<i64: 1, 64>}, {pipeline_mode = #tpu.pipeline_mode<synchronous>, transform_indices = @transform_6, window_bounds = array<i64: 4, 8, 32>}, {pipeline_mode = #tpu.pipeline_mode<synchronous>, transform_indices = @transform_7, window_bounds = array<i64: 1, 32>}, {pipeline_mode = #tpu.pipeline_mode<synchronous>, transform_indices = @transform_8, window_bounds = array<i64: 1, 32>}, {pipeline_mode = #tpu.pipeline_mode<synchronous>, transform_indices = @transform_9, window_bounds = array<i64: 1, 32>}, {transform_indices = @transform_10, window_bounds = array<i64: 16, 32>}]} {
    %c0 = arith.constant 0 : index
    %c0_0 = arith.constant 0 : index
    %0 = vector.load %arg1[%c0, %c0_0] : memref<16x32xf32, #tpu.memory_space<vmem>>, vector<16x32xf32>
    %c0_1 = arith.constant 0 : index
    %c0_2 = arith.constant 0 : index
    %1 = vector.load %arg2[%c0_1, %c0_2] : memref<16x32xf32, #tpu.memory_space<vmem>>, vector<16x32xf32>
    %c0_3 = arith.constant 0 : index
    %c0_4 = arith.constant 0 : index
    %2 = vector.load %arg3[%c0_3, %c0_4] : memref<32x32xf32, #tpu.memory_space<vmem>>, vector<32x32xf32>
    %cst = arith.constant dense<0.000000e+00> : vector<16x32xf32>
    %3 = tpu.matmul %0, %2, %cst {dimension_numbers = #tpu.dot_dimension_numbers<[1], [0], [0], [1], [0, 0, 1, 1], [], []>} : vector<16x32xf32>, vector<32x32xf32>, vector<16x32xf32> -> vector<16x32xf32>
    %c0_5 = arith.constant 0 : index
    %c0_6 = arith.constant 0 : index
    %4 = vector.load %arg4[%c0_5, %c0_6] : memref<1x32xf32, #tpu.memory_space<vmem>>, vector<1x32xf32>
    %5 = vector.broadcast %4 : vector<1x32xf32> to vector<16x32xf32>
    %6 = arith.addf %3, %5 : vector<16x32xf32>
    %c0_7 = arith.constant 0 : index
    %c0_8 = arith.constant 0 : index
    %7 = vector.load %arg5[%c0_7, %c0_8] : memref<32x64xf32, #tpu.memory_space<vmem>>, vector<32x64xf32>
    %cst_9 = arith.constant dense<0.000000e+00> : vector<16x64xf32>
    %8 = tpu.matmul %1, %7, %cst_9 {dimension_numbers = #tpu.dot_dimension_numbers<[1], [0], [0], [1], [0, 0, 1, 1], [], []>} : vector<16x32xf32>, vector<32x64xf32>, vector<16x64xf32> -> vector<16x64xf32>
    %c0_10 = arith.constant 0 : index
    %c0_11 = arith.constant 0 : index
    %9 = vector.load %arg6[%c0_10, %c0_11] : memref<1x64xf32, #tpu.memory_space<vmem>>, vector<1x64xf32>
    %10 = vector.broadcast %9 : vector<1x64xf32> to vector<16x64xf32>
    %11 = arith.addf %8, %10 : vector<16x64xf32>
    %cst_12 = arith.constant 0.353553385 : f32
    %12 = vector.broadcast %cst_12 : f32 to vector<16x32xf32>
    %13 = arith.mulf %6, %12 : vector<16x32xf32>
    %14 = vector.extract_strided_slice %11 {offsets = [0, 0], sizes = [16, 32], strides = [1, 1]} : vector<16x64xf32> to vector<16x32xf32>
    %15 = vector.extract_strided_slice %11 {offsets = [0, 32], sizes = [16, 32], strides = [1, 1]} : vector<16x64xf32> to vector<16x32xf32>
    %cst_13 = arith.constant 0.000000e+00 : f32
    %16 = vector.broadcast %cst_13 : f32 to vector<16x32xf32>
    %17 = vector.extract_strided_slice %13 {offsets = [0, 0], sizes = [16, 8], strides = [1, 1]} : vector<16x32xf32> to vector<16x8xf32>
    %18 = vector.extract_strided_slice %14 {offsets = [0, 0], sizes = [16, 8], strides = [1, 1]} : vector<16x32xf32> to vector<16x8xf32>
    %cst_14 = arith.constant dense<0.000000e+00> : vector<16x16xf32>
    %19 = tpu.matmul %17, %18, %cst_14 {dimension_numbers = #tpu.dot_dimension_numbers<[1], [1], [0], [0], [0, 0, 1, 0], [], []>} : vector<16x8xf32>, vector<16x8xf32>, vector<16x16xf32> -> vector<16x16xf32>
    %cst_15 = arith.constant dense<0xFF800000> : vector<16xf32>
    %20 = vector.multi_reduction <maximumf>, %19, %cst_15 [1] : vector<16x16xf32> to vector<16xf32>
    %21 = vector.shape_cast %20 : vector<16xf32> to vector<16x1xf32>
    %22 = vector.broadcast %21 : vector<16x1xf32> to vector<16x16xf32>
    %23 = arith.subf %19, %22 : vector<16x16xf32>
    %24 = math.exp %23 : vector<16x16xf32>
    %cst_16 = arith.constant dense<0.000000e+00> : vector<16xf32>
    %25 = vector.multi_reduction <add>, %24, %cst_16 [1] : vector<16x16xf32> to vector<16xf32>
    %26 = vector.shape_cast %25 : vector<16xf32> to vector<16x1xf32>
    %27 = tpu.reciprocal %26 : vector<16x1xf32> -> vector<16x1xf32>
    %28 = vector.extract_strided_slice %15 {offsets = [0, 0], sizes = [16, 8], strides = [1, 1]} : vector<16x32xf32> to vector<16x8xf32>
    %cst_17 = arith.constant dense<0.000000e+00> : vector<16x8xf32>
    %29 = tpu.matmul %24, %28, %cst_17 {dimension_numbers = #tpu.dot_dimension_numbers<[1], [0], [0], [1], [0, 0, 1, 1], [], []>} : vector<16x16xf32>, vector<16x8xf32>, vector<16x8xf32> -> vector<16x8xf32>
    %30 = vector.broadcast %27 : vector<16x1xf32> to vector<16x8xf32>
    %31 = arith.mulf %29, %30 : vector<16x8xf32>
    %c0_18 = arith.constant 0 : index
    %c0_19 = arith.constant 0 : index
    %c0_20 = arith.constant 0 : index
    %32 = vector.load %arg7[%c0_18, %c0_19, %c0_20] : memref<4x8x32xf32, #tpu.memory_space<vmem>>, vector<1x8x32xf32>
    %33 = vector.shape_cast %32 : vector<1x8x32xf32> to vector<8x32xf32>
    %cst_21 = arith.constant dense<0.000000e+00> : vector<16x32xf32>
    %34 = tpu.matmul %31, %33, %cst_21 {dimension_numbers = #tpu.dot_dimension_numbers<[1], [0], [0], [1], [0, 0, 1, 1], [], []>} : vector<16x8xf32>, vector<8x32xf32>, vector<16x32xf32> -> vector<16x32xf32>
    %35 = arith.addf %16, %34 : vector<16x32xf32>
    %36 = vector.extract_strided_slice %13 {offsets = [0, 8], sizes = [16, 8], strides = [1, 1]} : vector<16x32xf32> to vector<16x8xf32>
    %37 = vector.extract_strided_slice %14 {offsets = [0, 8], sizes = [16, 8], strides = [1, 1]} : vector<16x32xf32> to vector<16x8xf32>
    %cst_22 = arith.constant dense<0.000000e+00> : vector<16x16xf32>
    %38 = tpu.matmul %36, %37, %cst_22 {dimension_numbers = #tpu.dot_dimension_numbers<[1], [1], [0], [0], [0, 0, 1, 0], [], []>} : vector<16x8xf32>, vector<16x8xf32>, vector<16x16xf32> -> vector<16x16xf32>
    %cst_23 = arith.constant dense<0xFF800000> : vector<16xf32>
    %39 = vector.multi_reduction <maximumf>, %38, %cst_23 [1] : vector<16x16xf32> to vector<16xf32>
    %40 = vector.shape_cast %39 : vector<16xf32> to vector<16x1xf32>
    %41 = vector.broadcast %40 : vector<16x1xf32> to vector<16x16xf32>
    %42 = arith.subf %38, %41 : vector<16x16xf32>
    %43 = math.exp %42 : vector<16x16xf32>
    %cst_24 = arith.constant dense<0.000000e+00> : vector<16xf32>
    %44 = vector.multi_reduction <add>, %43, %cst_24 [1] : vector<16x16xf32> to vector<16xf32>
    %45 = vector.shape_cast %44 : vector<16xf32> to vector<16x1xf32>
    %46 = tpu.reciprocal %45 : vector<16x1xf32> -> vector<16x1xf32>
    %47 = vector.extract_strided_slice %15 {offsets = [0, 8], sizes = [16, 8], strides = [1, 1]} : vector<16x32xf32> to vector<16x8xf32>
    %cst_25 = arith.constant dense<0.000000e+00> : vector<16x8xf32>
    %48 = tpu.matmul %43, %47, %cst_25 {dimension_numbers = #tpu.dot_dimension_numbers<[1], [0], [0], [1], [0, 0, 1, 1], [], []>} : vector<16x16xf32>, vector<16x8xf32>, vector<16x8xf32> -> vector<16x8xf32>
    %49 = vector.broadcast %46 : vector<16x1xf32> to vector<16x8xf32>
    %50 = arith.mulf %48, %49 : vector<16x8xf32>
    %c1 = arith.constant 1 : index
    %c0_26 = arith.constant 0 : index
    %c0_27 = arith.constant 0 : index
    %51 = vector.load %arg7[%c1, %c0_26, %c0_27] : memref<4x8x32xf32, #tpu.memory_space<vmem>>, vector<1x8x32xf32>
    %52 = vector.shape_cast %51 : vector<1x8x32xf32> to vector<8x32xf32>
    %cst_28 = arith.constant dense<0.000000e+00> : vector<16x32xf32>
    %53 = tpu.matmul %50, %52, %cst_28 {dimension_numbers = #tpu.dot_dimension_numbers<[1], [0], [0], [1], [0, 0, 1, 1], [], []>} : vector<16x8xf32>, vector<8x32xf32>, vector<16x32xf32> -> vector<16x32xf32>
    %54 = arith.addf %35, %53 : vector<16x32xf32>
    %55 = vector.extract_strided_slice %13 {offsets = [0, 16], sizes = [16, 8], strides = [1, 1]} : vector<16x32xf32> to vector<16x8xf32>
    %56 = vector.extract_strided_slice %14 {offsets = [0, 16], sizes = [16, 8], strides = [1, 1]} : vector<16x32xf32> to vector<16x8xf32>
    %cst_29 = arith.constant dense<0.000000e+00> : vector<16x16xf32>
    %57 = tpu.matmul %55, %56, %cst_29 {dimension_numbers = #tpu.dot_dimension_numbers<[1], [1], [0], [0], [0, 0, 1, 0], [], []>} : vector<16x8xf32>, vector<16x8xf32>, vector<16x16xf32> -> vector<16x16xf32>
    %cst_30 = arith.constant dense<0xFF800000> : vector<16xf32>
    %58 = vector.multi_reduction <maximumf>, %57, %cst_30 [1] : vector<16x16xf32> to vector<16xf32>
    %59 = vector.shape_cast %58 : vector<16xf32> to vector<16x1xf32>
    %60 = vector.broadcast %59 : vector<16x1xf32> to vector<16x16xf32>
    %61 = arith.subf %57, %60 : vector<16x16xf32>
    %62 = math.exp %61 : vector<16x16xf32>
    %cst_31 = arith.constant dense<0.000000e+00> : vector<16xf32>
    %63 = vector.multi_reduction <add>, %62, %cst_31 [1] : vector<16x16xf32> to vector<16xf32>
    %64 = vector.shape_cast %63 : vector<16xf32> to vector<16x1xf32>
    %65 = tpu.reciprocal %64 : vector<16x1xf32> -> vector<16x1xf32>
    %66 = vector.extract_strided_slice %15 {offsets = [0, 16], sizes = [16, 8], strides = [1, 1]} : vector<16x32xf32> to vector<16x8xf32>
    %cst_32 = arith.constant dense<0.000000e+00> : vector<16x8xf32>
    %67 = tpu.matmul %62, %66, %cst_32 {dimension_numbers = #tpu.dot_dimension_numbers<[1], [0], [0], [1], [0, 0, 1, 1], [], []>} : vector<16x16xf32>, vector<16x8xf32>, vector<16x8xf32> -> vector<16x8xf32>
    %68 = vector.broadcast %65 : vector<16x1xf32> to vector<16x8xf32>
    %69 = arith.mulf %67, %68 : vector<16x8xf32>
    %c2 = arith.constant 2 : index
    %c0_33 = arith.constant 0 : index
    %c0_34 = arith.constant 0 : index
    %70 = vector.load %arg7[%c2, %c0_33, %c0_34] : memref<4x8x32xf32, #tpu.memory_space<vmem>>, vector<1x8x32xf32>
    %71 = vector.shape_cast %70 : vector<1x8x32xf32> to vector<8x32xf32>
    %cst_35 = arith.constant dense<0.000000e+00> : vector<16x32xf32>
    %72 = tpu.matmul %69, %71, %cst_35 {dimension_numbers = #tpu.dot_dimension_numbers<[1], [0], [0], [1], [0, 0, 1, 1], [], []>} : vector<16x8xf32>, vector<8x32xf32>, vector<16x32xf32> -> vector<16x32xf32>
    %73 = arith.addf %54, %72 : vector<16x32xf32>
    %74 = vector.extract_strided_slice %13 {offsets = [0, 24], sizes = [16, 8], strides = [1, 1]} : vector<16x32xf32> to vector<16x8xf32>
    %75 = vector.extract_strided_slice %14 {offsets = [0, 24], sizes = [16, 8], strides = [1, 1]} : vector<16x32xf32> to vector<16x8xf32>
    %cst_36 = arith.constant dense<0.000000e+00> : vector<16x16xf32>
    %76 = tpu.matmul %74, %75, %cst_36 {dimension_numbers = #tpu.dot_dimension_numbers<[1], [1], [0], [0], [0, 0, 1, 0], [], []>} : vector<16x8xf32>, vector<16x8xf32>, vector<16x16xf32> -> vector<16x16xf32>
    %cst_37 = arith.constant dense<0xFF800000> : vector<16xf32>
    %77 = vector.multi_reduction <maximumf>, %76, %cst_37 [1] : vector<16x16xf32> to vector<16xf32>
    %78 = vector.shape_cast %77 : vector<16xf32> to vector<16x1xf32>
    %79 = vector.broadcast %78 : vector<16x1xf32> to vector<16x16xf32>
    %80 = arith.subf %76, %79 : vector<16x16xf32>
    %81 = math.exp %80 : vector<16x16xf32>
    %cst_38 = arith.constant dense<0.000000e+00> : vector<16xf32>
    %82 = vector.multi_reduction <add>, %81, %cst_38 [1] : vector<16x16xf32> to vector<16xf32>
    %83 = vector.shape_cast %82 : vector<16xf32> to vector<16x1xf32>
    %84 = tpu.reciprocal %83 : vector<16x1xf32> -> vector<16x1xf32>
    %85 = vector.extract_strided_slice %15 {offsets = [0, 24], sizes = [16, 8], strides = [1, 1]} : vector<16x32xf32> to vector<16x8xf32>
    %cst_39 = arith.constant dense<0.000000e+00> : vector<16x8xf32>
    %86 = tpu.matmul %81, %85, %cst_39 {dimension_numbers = #tpu.dot_dimension_numbers<[1], [0], [0], [1], [0, 0, 1, 1], [], []>} : vector<16x16xf32>, vector<16x8xf32>, vector<16x8xf32> -> vector<16x8xf32>
    %87 = vector.broadcast %84 : vector<16x1xf32> to vector<16x8xf32>
    %88 = arith.mulf %86, %87 : vector<16x8xf32>
    %c3 = arith.constant 3 : index
    %c0_40 = arith.constant 0 : index
    %c0_41 = arith.constant 0 : index
    %89 = vector.load %arg7[%c3, %c0_40, %c0_41] : memref<4x8x32xf32, #tpu.memory_space<vmem>>, vector<1x8x32xf32>
    %90 = vector.shape_cast %89 : vector<1x8x32xf32> to vector<8x32xf32>
    %cst_42 = arith.constant dense<0.000000e+00> : vector<16x32xf32>
    %91 = tpu.matmul %88, %90, %cst_42 {dimension_numbers = #tpu.dot_dimension_numbers<[1], [0], [0], [1], [0, 0, 1, 1], [], []>} : vector<16x8xf32>, vector<8x32xf32>, vector<16x32xf32> -> vector<16x32xf32>
    %92 = arith.addf %73, %91 : vector<16x32xf32>
    %93 = arith.addf %0, %92 : vector<16x32xf32>
    %c0_43 = arith.constant 0 : index
    %c0_44 = arith.constant 0 : index
    %94 = vector.load %arg8[%c0_43, %c0_44] : memref<1x32xf32, #tpu.memory_space<vmem>>, vector<1x32xf32>
    %95 = vector.broadcast %94 : vector<1x32xf32> to vector<16x32xf32>
    %96 = arith.addf %93, %95 : vector<16x32xf32>
    %cst_45 = arith.constant dense<0.000000e+00> : vector<16xf32>
    %97 = vector.multi_reduction <add>, %96, %cst_45 [1] : vector<16x32xf32> to vector<16xf32>
    %98 = vector.shape_cast %97 : vector<16xf32> to vector<16x1xf32>
    %cst_46 = arith.constant 3.200000e+01 : f32
    %99 = vector.broadcast %cst_46 : f32 to vector<16x1xf32>
    %100 = arith.divf %98, %99 : vector<16x1xf32>
    %101 = vector.broadcast %100 : vector<16x1xf32> to vector<16x32xf32>
    %102 = arith.subf %96, %101 : vector<16x32xf32>
    %103 = arith.mulf %102, %102 : vector<16x32xf32>
    %cst_47 = arith.constant dense<0.000000e+00> : vector<16xf32>
    %104 = vector.multi_reduction <add>, %103, %cst_47 [1] : vector<16x32xf32> to vector<16xf32>
    %105 = vector.shape_cast %104 : vector<16xf32> to vector<16x1xf32>
    %cst_48 = arith.constant 3.200000e+01 : f32
    %106 = vector.broadcast %cst_48 : f32 to vector<16x1xf32>
    %107 = arith.divf %105, %106 : vector<16x1xf32>
    %cst_49 = arith.constant 9.99999974E-6 : f32
    %108 = vector.broadcast %cst_49 : f32 to vector<16x1xf32>
    %109 = arith.addf %107, %108 : vector<16x1xf32>
    %110 = math.rsqrt %109 : vector<16x1xf32>
    %111 = vector.broadcast %110 : vector<16x1xf32> to vector<16x32xf32>
    %112 = arith.mulf %102, %111 : vector<16x32xf32>
    %c0_50 = arith.constant 0 : index
    %c0_51 = arith.constant 0 : index
    %113 = vector.load %arg9[%c0_50, %c0_51] : memref<1x32xf32, #tpu.memory_space<vmem>>, vector<1x32xf32>
    %114 = vector.broadcast %113 : vector<1x32xf32> to vector<16x32xf32>
    %115 = arith.mulf %112, %114 : vector<16x32xf32>
    %c0_52 = arith.constant 0 : index
    %c0_53 = arith.constant 0 : index
    %116 = vector.load %arg10[%c0_52, %c0_53] : memref<1x32xf32, #tpu.memory_space<vmem>>, vector<1x32xf32>
    %117 = vector.broadcast %116 : vector<1x32xf32> to vector<16x32xf32>
    %118 = arith.addf %115, %117 : vector<16x32xf32>
    %c0_54 = arith.constant 0 : index
    %c0_55 = arith.constant 0 : index
    %119 = vector.load %arg11[%c0_54, %c0_55] : memref<16x32xf32, #tpu.memory_space<vmem>>, vector<16x32xf32>
    tpu.vector_store %arg11[%c0_54, %c0_55], %118 {strides = array<i32>} : memref<16x32xf32, #tpu.memory_space<vmem>>, vector<16x32xf32>,
    return
  }
  func.func @transform_0(%arg0: i32) -> (i32, i32) {
    %c0_i32 = arith.constant 0 : i32
    %c0_i32_0 = arith.constant 0 : i32
    return %arg0, %c0_i32 : i32, i32
  }
  func.func @transform_1(%arg0: i32) -> (i32, i32) {
    %c0_i32 = arith.constant 0 : i32
    %c0_i32_0 = arith.constant 0 : i32
    return %arg0, %c0_i32 : i32, i32
  }
  func.func @transform_2(%arg0: i32) -> (i32, i32) {
    %c0_i32 = arith.constant 0 : i32
    %c0_i32_0 = arith.constant 0 : i32
    %c0_i32_1 = arith.constant 0 : i32
    return %c0_i32, %c0_i32_0 : i32, i32
  }
  func.func @transform_3(%arg0: i32) -> (i32, i32) {
    %c0_i32 = arith.constant 0 : i32
    %c0_i32_0 = arith.constant 0 : i32
    %c0_i32_1 = arith.constant 0 : i32
    return %c0_i32, %c0_i32_0 : i32, i32
  }
  func.func @transform_4(%arg0: i32) -> (i32, i32) {
    %c0_i32 = arith.constant 0 : i32
    %c0_i32_0 = arith.constant 0 : i32
    %c0_i32_1 = arith.constant 0 : i32
    return %c0_i32, %c0_i32_0 : i32, i32
  }
  func.func @transform_5(%arg0: i32) -> (i32, i32) {
    %c0_i32 = arith.constant 0 : i32
    %c0_i32_0 = arith.constant 0 : i32
    %c0_i32_1 = arith.constant 0 : i32
    return %c0_i32, %c0_i32_0 : i32, i32
  }
  func.func @transform_6(%arg0: i32) -> (i32, i32, i32) {
    %c0_i32 = arith.constant 0 : i32
    %c0_i32_0 = arith.constant 0 : i32
    %c0_i32_1 = arith.constant 0 : i32
    %c0_i32_2 = arith.constant 0 : i32
    return %c0_i32, %c0_i32_0, %c0_i32_1 : i32, i32, i32
  }
  func.func @transform_7(%arg0: i32) -> (i32, i32) {
    %c0_i32 = arith.constant 0 : i32
    %c0_i32_0 = arith.constant 0 : i32
    %c0_i32_1 = arith.constant 0 : i32
    return %c0_i32, %c0_i32_0 : i32, i32
  }
  func.func @transform_8(%arg0: i32) -> (i32, i32) {
    %c0_i32 = arith.constant 0 : i32
    %c0_i32_0 = arith.constant 0 : i32
    %c0_i32_1 = arith.constant 0 : i32
    return %c0_i32, %c0_i32_0 : i32, i32
  }
  func.func @transform_9(%arg0: i32) -> (i32, i32) {
    %c0_i32 = arith.constant 0 : i32
    %c0_i32_0 = arith.constant 0 : i32
    %c0_i32_1 = arith.constant 0 : i32
    return %c0_i32, %c0_i32_0 : i32, i32
  }
  func.func @transform_10(%arg0: i32) -> (i32, i32) {
    %c0_i32 = arith.constant 0 : i32
    %c0_i32_0 = arith.constant 0 : i32
    return %arg0, %c0_i32 : i32, i32
  }
}

</mosaic_0001>

<llo_original>
// kernel: tpu_custom_call.1
$region0: #{tpu_custom_call.1}
  #allocation0 [shape = 'u32[]', space=smem, size = 0x4, offset = 0x4, fixed_abs, tag = 'smem constant byte address 0x4 - core index']
  #allocation1 [shape = 'u32[144,128]{1,0:T(1,128)}', space=vmem, size = 0x12000, scoped, tag = 'internal scratch']
  %s0 = inlined_call_operand.hbm [shape: f32[32,32], index: 0, kind: input, shape index: {}]
  %s1 = inlined_call_operand.hbm [shape: f32[32,32], index: 1, kind: input, shape index: {}]
  %s2 = inlined_call_operand.hbm [shape: f32[32,32], index: 2, kind: input, shape index: {}]
  %s3 = inlined_call_operand.vmem [shape: f32[1,32], index: 3, kind: input, shape index: {}]
  %s4 = inlined_call_operand.hbm [shape: f32[32,64], index: 4, kind: input, shape index: {}]
  %s5 = inlined_call_operand.vmem [shape: f32[1,64], index: 5, kind: input, shape index: {}]
  %s6 = inlined_call_operand.hbm [shape: f32[4,8,32], index: 6, kind: input, shape index: {}]
  %s7 = inlined_call_operand.vmem [shape: f32[1,32], index: 7, kind: input, shape index: {}]
  %s8 = inlined_call_operand.vmem [shape: f32[1,32], index: 8, kind: input, shape index: {}]
  %s9 = inlined_call_operand.vmem [shape: f32[1,32], index: 9, kind: input, shape index: {}]
  %s10 = inlined_call_operand.hbm [shape: f32[32,32], index: 10, kind: output, shape index: {}]
  %s11 = sld [smem:[#allocation0]]
  $region93: #{tpu_custom_call.1} parent=0
    _
  %s13 = ssub.s32 1, %s11
  %s14 = scalar_select 0, %s13, %s11
  $region1: #{tpu_custom_call.1} parent=0
    #allocation2 [shape = 'u8[16384]{0}', space=vmem, size = 0x4000, scoped, tag = 'input window, operand 0']
    #allocation3 [shape = 's32[2]{0}', space=sflag, size = 0x8, scoped, tag = 'scoped memory for tpu_custom_call.1']
    #allocation4 [shape = 's32[2]{0}', space=sflag, size = 0x8, scoped, tag = 'scoped memory for tpu_custom_call.1']
    #allocation5 [shape = 'u8[16384]{0}', space=vmem, size = 0x4000, scoped, tag = 'input window, operand 1']
    #allocation6 [shape = 's32[2]{0}', space=sflag, size = 0x8, scoped, tag = 'scoped memory for tpu_custom_call.1']
    #allocation7 [shape = 'u8[16384]{0}', space=vmem, size = 0x4000, scoped, tag = 'input window, operand 2, single buffered']
    #allocation8 [shape = 'u8[16384]{0}', space=vmem, size = 0x4000, scoped, tag = 'input window, operand 4, single buffered']
    #allocation9 [shape = 's32[1]{0}', space=sflag, size = 0x4, scoped, tag = 'scoped memory for tpu_custom_call.1']
    #allocation10 [shape = 'u8[16384]{0}', space=vmem, size = 0x4000, scoped, tag = 'input window, operand 6, single buffered']
    #allocation11 [shape = 'u8[16384]{0}', space=vmem, size = 0x4000, scoped, tag = 'output window, operand 0']
    %15 = vsyncpa [#allocation3], 0
    %s16 = scalar_lea.sflag [#allocation3], 1
    %17 = vsyncpa %s16, 0
    %18 = vsyncpa [#allocation6], 0
    %s19 = scalar_lea.sflag [#allocation6], 1
    %20 = vsyncpa %s19, 0
    %21 = vsyncpa [#allocation9], 0
    %22 = vsyncpa [#allocation4], 0
    %s23 = scalar_lea.sflag [#allocation4], 1
    %24 = vsyncpa %s23, 0
    loop: start=0, step=1, limit=4
    $region2: #{tpu_custom_call.1} parent=1 // loop_pre_header
      _
    $region3: #{tpu_custom_call.1} parent=1 // loop_header
      %s26 = sphi 0, %s30
      %p27 = scmp.ge.s32.totalorder %s26, 4
      %s36 = sphi 0, %s38
      %s39 = sphi 0, %s36
      %s40 = sphi 0, %s39
      %s56 = sphi 0, %s40
      %s62 = sphi 0, %s64
      %s65 = sphi 0, %s62
      %s66 = sphi 0, %s65
      %s82 = sphi 0, %s66
      %s86 = sphi 0, %s86
      %s88 = sphi 0, %s86
      %s89 = sphi 0, %s88
      %s103 = sphi 0, %s89
      %s107 = sphi 0, %s107
      %s109 = sphi 0, %s107
      %s110 = sphi 0, %s109
      %s124 = sphi 0, %s110
      %s128 = sphi 0, %s128
      %s130 = sphi 0, %s128
      %s131 = sphi 0, %s130
      %s145 = sphi 0, %s131
      %s149 = sphi 0, %s149
      %s151 = sphi 0, %s149
      %s152 = sphi 0, %s151
      %s166 = sphi 0, %s152
      %s170 = sphi 0, %s170
      %s172 = sphi 0, %s170
      %s173 = sphi 0, %s172
      %s187 = sphi 0, %s173
      %s191 = sphi 0, %s191
      %s193 = sphi 0, %s191
      %s194 = sphi 0, %s193
      %s208 = sphi 0, %s194
      %s212 = sphi 0, %s212
      %s214 = sphi 0, %s212
      %s215 = sphi 0, %s214
      %s229 = sphi 0, %s215
      %s233 = sphi 0, %s233
      %s235 = sphi 0, %s233
      %s236 = sphi 0, %s235
      %s250 = sphi 0, %s236
      %s256 = sphi 0, %s258
      %s259 = sphi 0, %s256
      %s260 = sphi 0, %s259
      %s276 = sphi 0, %s260
    $region4: #{tpu_custom_call.1} parent=1 // loop_header_branch
      %29 = sbr.rel (%p27) target = $region8
    $region5: #{tpu_custom_call.1} parent=1 // loop_body
      %s31 = ssub.s32 %s26, 1
      %s32 = ssub.s32 %s26, 2
      %s33 = sadd.s32 %s26, 1
      %s34 = ssub.s32 %s26, %s33
      %p35 = scmp.eq.s32.totalorder %s34, 0
      %s37 = sadd.s32 %s36, 1
      %s38 = scalar_select %p35, %s36, %s37
      %p41 = pneg %p35
      %p42 = scmp.eq.s32.totalorder %s26, 1
      %p43 = por %p41, %p42
      %p44 = scmp.ne.s32.totalorder %s36, %s39
      %p45 = scmp.eq.s32.totalorder %s26, 0
      %p46 = por %p44, %p45
      %p47 = scmp.ne.s32.totalorder %s36, %s39
      %p48 = scmp.eq.s32.totalorder %s31, 1
      %p49 = por %p47, %p48
      %p50 = scmp.ne.s32.totalorder %s39, %s40
      %p51 = scmp.eq.s32.totalorder %s31, 0
      %p52 = por %p50, %p51
      %p53 = scmp.ne.s32.totalorder %s39, %s40
      %p54 = scmp.eq.s32.totalorder %s32, 1
      %p55 = por %p53, %p54
      %p57 = scmp.ne.s32.totalorder %s40, %s56
      %p58 = scmp.eq.s32.totalorder %s32, 0
      %p59 = por %p57, %p58
      %s60 = ssub.s32 %s26, %s33
      %p61 = scmp.eq.s32.totalorder %s60, 0
      %s63 = sadd.s32 %s62, 1
      %s64 = scalar_select %p61, %s62, %s63
      %p67 = pneg %p61
      %p68 = scmp.eq.s32.totalorder %s26, 1
      %p69 = por %p67, %p68
      %p70 = scmp.ne.s32.totalorder %s62, %s65
      %p71 = scmp.eq.s32.totalorder %s26, 0
      %p72 = por %p70, %p71
      %p73 = scmp.ne.s32.totalorder %s62, %s65
      %p74 = scmp.eq.s32.totalorder %s31, 1
      %p75 = por %p73, %p74
      %p76 = scmp.ne.s32.totalorder %s65, %s66
      %p77 = scmp.eq.s32.totalorder %s31, 0
      %p78 = por %p76, %p77
      %p79 = scmp.ne.s32.totalorder %s65, %s66
      %p80 = scmp.eq.s32.totalorder %s32, 1
      %p81 = por %p79, %p80
      %p83 = scmp.ne.s32.totalorder %s66, %s82
      %p84 = scmp.eq.s32.totalorder %s32, 0
      %p85 = por %p83, %p84
      %s87 = sadd.s32 %s86, 1
      %p90 = scmp.eq.s32.totalorder %s26, 1
      %p91 = scmp.ne.s32.totalorder %s86, %s88
      %p92 = scmp.eq.s32.totalorder %s26, 0
      %p93 = por %p91, %p92
      %p94 = scmp.ne.s32.totalorder %s86, %s88
      %p95 = scmp.eq.s32.totalorder %s31, 1
      %p96 = por %p94, %p95
      %p97 = scmp.ne.s32.totalorder %s88, %s89
      %p98 = scmp.eq.s32.totalorder %s31, 0
      %p99 = por %p97, %p98
      %p100 = scmp.ne.s32.totalorder %s88, %s89
      %p101 = scmp.eq.s32.totalorder %s32, 1
      %p102 = por %p100, %p101
      %p104 = scmp.ne.s32.totalorder %s89, %s103
      %p105 = scmp.eq.s32.totalorder %s32, 0
      %p106 = por %p104, %p105
      %s108 = sadd.s32 %s107, 1
      %p111 = scmp.eq.s32.totalorder %s26, 1
      %p112 = scmp.ne.s32.totalorder %s107, %s109
      %p113 = scmp.eq.s32.totalorder %s26, 0
      %p114 = por %p112, %p113
      %p115 = scmp.ne.s32.totalorder %s107, %s109
      %p116 = scmp.eq.s32.totalorder %s31, 1
      %p117 = por %p115, %p116
      %p118 = scmp.ne.s32.totalorder %s109, %s110
      %p119 = scmp.eq.s32.totalorder %s31, 0
      %p120 = por %p118, %p119
      %p121 = scmp.ne.s32.totalorder %s109, %s110
      %p122 = scmp.eq.s32.totalorder %s32, 1
      %p123 = por %p121, %p122
      %p125 = scmp.ne.s32.totalorder %s110, %s124
      %p126 = scmp.eq.s32.totalorder %s32, 0
      %p127 = por %p125, %p126
      %s129 = sadd.s32 %s128, 1
      %p132 = scmp.eq.s32.totalorder %s26, 1
      %p133 = scmp.ne.s32.totalorder %s128, %s130
      %p134 = scmp.eq.s32.totalorder %s26, 0
      %p135 = por %p133, %p134
      %p136 = scmp.ne.s32.totalorder %s128, %s130
      %p137 = scmp.eq.s32.totalorder %s31, 1
      %p138 = por %p136, %p137
      %p139 = scmp.ne.s32.totalorder %s130, %s131
      %p140 = scmp.eq.s32.totalorder %s31, 0
      %p141 = por %p139, %p140
      %p142 = scmp.ne.s32.totalorder %s130, %s131
      %p143 = scmp.eq.s32.totalorder %s32, 1
      %p144 = por %p142, %p143
      %p146 = scmp.ne.s32.totalorder %s131, %s145
      %p147 = scmp.eq.s32.totalorder %s32, 0
      %p148 = por %p146, %p147
      %s150 = sadd.s32 %s149, 1
      %p153 = scmp.eq.s32.totalorder %s26, 1
      %p154 = scmp.ne.s32.totalorder %s149, %s151
      %p155 = scmp.eq.s32.totalorder %s26, 0
      %p156 = por %p154, %p155
      %p157 = scmp.ne.s32.totalorder %s149, %s151
      %p158 = scmp.eq.s32.totalorder %s31, 1
      %p159 = por %p157, %p158
      %p160 = scmp.ne.s32.totalorder %s151, %s152
      %p161 = scmp.eq.s32.totalorder %s31, 0
      %p162 = por %p160, %p161
      %p163 = scmp.ne.s32.totalorder %s151, %s152
      %p164 = scmp.eq.s32.totalorder %s32, 1
      %p165 = por %p163, %p164
      %p167 = scmp.ne.s32.totalorder %s152, %s166
      %p168 = scmp.eq.s32.totalorder %s32, 0
      %p169 = por %p167, %p168
      %s171 = sadd.s32 %s170, 1
      %p174 = scmp.eq.s32.totalorder %s26, 1
      %p175 = scmp.ne.s32.totalorder %s170, %s172
      %p176 = scmp.eq.s32.totalorder %s26, 0
      %p177 = por %p175, %p176
      %p178 = scmp.ne.s32.totalorder %s170, %s172
      %p179 = scmp.eq.s32.totalorder %s31, 1
      %p180 = por %p178, %p179
      %p181 = scmp.ne.s32.totalorder %s172, %s173
      %p182 = scmp.eq.s32.totalorder %s31, 0
      %p183 = por %p181, %p182
      %p184 = scmp.ne.s32.totalorder %s172, %s173
      %p185 = scmp.eq.s32.totalorder %s32, 1
      %p186 = por %p184, %p185
      %p188 = scmp.ne.s32.totalorder %s173, %s187
      %p189 = scmp.eq.s32.totalorder %s32, 0
      %p190 = por %p188, %p189
      %s192 = sadd.s32 %s191, 1
      %p195 = scmp.eq.s32.totalorder %s26, 1
      %p196 = scmp.ne.s32.totalorder %s191, %s193
      %p197 = scmp.eq.s32.totalorder %s26, 0
      %p198 = por %p196, %p197
      %p199 = scmp.ne.s32.totalorder %s191, %s193
      %p200 = scmp.eq.s32.totalorder %s31, 1
      %p201 = por %p199, %p200
      %p202 = scmp.ne.s32.totalorder %s193, %s194
      %p203 = scmp.eq.s32.totalorder %s31, 0
      %p204 = por %p202, %p203
      %p205 = scmp.ne.s32.totalorder %s193, %s194
      %p206 = scmp.eq.s32.totalorder %s32, 1
      %p207 = por %p205, %p206
      %p209 = scmp.ne.s32.totalorder %s194, %s208
      %p210 = scmp.eq.s32.totalorder %s32, 0
      %p211 = por %p209, %p210
      %s213 = sadd.s32 %s212, 1
      %p216 = scmp.eq.s32.totalorder %s26, 1
      %p217 = scmp.ne.s32.totalorder %s212, %s214
      %p218 = scmp.eq.s32.totalorder %s26, 0
      %p219 = por %p217, %p218
      %p220 = scmp.ne.s32.totalorder %s212, %s214
      %p221 = scmp.eq.s32.totalorder %s31, 1
      %p222 = por %p220, %p221
      %p223 = scmp.ne.s32.totalorder %s214, %s215
      %p224 = scmp.eq.s32.totalorder %s31, 0
      %p225 = por %p223, %p224
      %p226 = scmp.ne.s32.totalorder %s214, %s215
      %p227 = scmp.eq.s32.totalorder %s32, 1
      %p228 = por %p226, %p227
      %p230 = scmp.ne.s32.totalorder %s215, %s229
      %p231 = scmp.eq.s32.totalorder %s32, 0
      %p232 = por %p230, %p231
      %s234 = sadd.s32 %s233, 1
      %p237 = scmp.eq.s32.totalorder %s26, 1
      %p238 = scmp.ne.s32.totalorder %s233, %s235
      %p239 = scmp.eq.s32.totalorder %s26, 0
      %p240 = por %p238, %p239
      %p241 = scmp.ne.s32.totalorder %s233, %s235
      %p242 = scmp.eq.s32.totalorder %s31, 1
      %p243 = por %p241, %p242
      %p244 = scmp.ne.s32.totalorder %s235, %s236
      %p245 = scmp.eq.s32.totalorder %s31, 0
      %p246 = por %p244, %p245
      %p247 = scmp.ne.s32.totalorder %s235, %s236
      %p248 = scmp.eq.s32.totalorder %s32, 1
      %p249 = por %p247, %p248
      %p251 = scmp.ne.s32.totalorder %s236, %s250
      %p252 = scmp.eq.s32.totalorder %s32, 0
      %p253 = por %p251, %p252
      %s254 = ssub.s32 %s26, %s33
      %p255 = scmp.eq.s32.totalorder %s254, 0
      %s257 = sadd.s32 %s256, 1
      %s258 = scalar_select %p255, %s256, %s257
      %p261 = pneg %p255
      %p262 = scmp.eq.s32.totalorder %s26, 1
      %p263 = por %p261, %p262
      %p264 = scmp.ne.s32.totalorder %s256, %s259
      %p265 = scmp.eq.s32.totalorder %s26, 0
      %p266 = por %p264, %p265
      %p267 = scmp.ne.s32.totalorder %s256, %s259
      %p268 = scmp.eq.s32.totalorder %s31, 1
      %p269 = por %p267, %p268
      %p270 = scmp.ne.s32.totalorder %s259, %s260
      %p271 = scmp.eq.s32.totalorder %s31, 0
      %p272 = por %p270, %p271
      %p273 = scmp.ne.s32.totalorder %s259, %s260
      %p274 = scmp.eq.s32.totalorder %s32, 1
      %p275 = por %p273, %p274
      %p277 = scmp.ne.s32.totalorder %s260, %s276
      %p278 = scmp.eq.s32.totalorder %s32, 0
      %p279 = por %p277, %p278
      %p280 = scmp.le.s32.totalorder 1, %s26
      %p281 = scmp.lt.s32.totalorder %s26, 3
      %p282 = pnand %p280, %p281
      %p283 = pneg %p282
      // Predicated region
      $region9: #{tpu_custom_call.1} parent=5 // pred_check
        _
      $region10: #{tpu_custom_call.1} parent=5 // pred_check_branch
        %285 = sbr.rel (%p282) target = $region12
      $region11: #{tpu_custom_call.1} parent=5 // pred_region
        %s286 = ssub.s32 %s26, 1
        // Predicated region
        $region13: #{tpu_custom_call.1} parent=11 // pred_check
          %p287 = pneg %p99
        $region14: #{tpu_custom_call.1} parent=11 // pred_check_branch
          %289 = sbr.rel (%p287) target = $region16
        $region15: #{tpu_custom_call.1} parent=11 // pred_region
          %s291 = ssub.s32 512, 512
          %292 = vsyncadd [#allocation6], %s291
          %s293 = sshll.u32 [#allocation7], 4
          %s294 = int_to_ptr.vmem [resolvable:$true] %s293
          %299 = dma.hbm_to_vmem [thread:$0]  %s2, 512, %s294, [#allocation6], 128, 128, 8
        $region16: #{tpu_custom_call.1} parent=11 // pred_fallthru
          _
        // Predicated region
        $region17: #{tpu_custom_call.1} parent=11 // pred_check
          %p300 = pneg %p120
        $region18: #{tpu_custom_call.1} parent=11 // pred_check_branch
          %302 = sbr.rel (%p300) target = $region20
        $region19: #{tpu_custom_call.1} parent=11 // pred_region
          _
        $region20: #{tpu_custom_call.1} parent=11 // pred_fallthru
          _
        // Predicated region
        $region21: #{tpu_custom_call.1} parent=11 // pred_check
          %p303 = pneg %p141
        $region22: #{tpu_custom_call.1} parent=11 // pred_check_branch
          %305 = sbr.rel (%p303) target = $region24
        $region23: #{tpu_custom_call.1} parent=11 // pred_region
          %s307 = ssub.s32 512, 512
          %308 = vsyncadd [#allocation9], %s307
          %s309 = sshll.u32 [#allocation8], 4
          %s310 = int_to_ptr.vmem [resolvable:$true] %s309
          %315 = dma.hbm_to_vmem [thread:$0]  %s4, 512, %s310, [#allocation9], 128, 128, 8
        $region24: #{tpu_custom_call.1} parent=11 // pred_fallthru
          _
        // Predicated region
        $region25: #{tpu_custom_call.1} parent=11 // pred_check
          %p316 = pneg %p162
        $region26: #{tpu_custom_call.1} parent=11 // pred_check_branch
          %318 = sbr.rel (%p316) target = $region28
        $region27: #{tpu_custom_call.1} parent=11 // pred_region
          _
        $region28: #{tpu_custom_call.1} parent=11 // pred_fallthru
          _
        // Predicated region
        $region29: #{tpu_custom_call.1} parent=11 // pred_check
          %p319 = pneg %p183
        $region30: #{tpu_custom_call.1} parent=11 // pred_check_branch
          %321 = sbr.rel (%p319) target = $region32
        $region31: #{tpu_custom_call.1} parent=11 // pred_region
          %s323 = ssub.s32 512, 512
          %324 = vsyncadd [#allocation9], %s323
          %s325 = sshll.u32 [#allocation10], 4
          %s326 = int_to_ptr.vmem [resolvable:$true] %s325
          %331 = dma.hbm_to_vmem [thread:$0]  %s6, 512, %s326, [#allocation9], 128, 128, 8
        $region32: #{tpu_custom_call.1} parent=11 // pred_fallthru
          _
        // Predicated region
        $region33: #{tpu_custom_call.1} parent=11 // pred_check
          %p332 = pneg %p204
        $region34: #{tpu_custom_call.1} parent=11 // pred_check_branch
          %334 = sbr.rel (%p332) target = $region36
        $region35: #{tpu_custom_call.1} parent=11 // pred_region
          _
        $region36: #{tpu_custom_call.1} parent=11 // pred_fallthru
          _
        // Predicated region
        $region37: #{tpu_custom_call.1} parent=11 // pred_check
          %p335 = pneg %p225
        $region38: #{tpu_custom_call.1} parent=11 // pred_check_branch
          %337 = sbr.rel (%p335) target = $region40
        $region39: #{tpu_custom_call.1} parent=11 // pred_region
          _
        $region40: #{tpu_custom_call.1} parent=11 // pred_fallthru
          _
        // Predicated region
        $region41: #{tpu_custom_call.1} parent=11 // pred_check
          %p338 = pneg %p246
        $region42: #{tpu_custom_call.1} parent=11 // pred_check_branch
          %340 = sbr.rel (%p338) target = $region44
        $region43: #{tpu_custom_call.1} parent=11 // pred_region
          _
        $region44: #{tpu_custom_call.1} parent=11 // pred_fallthru
          _
      $region12: #{tpu_custom_call.1} parent=5 // pred_fallthru
        _
      %p341 = scmp.lt.s32.totalorder %s26, 2
      // Predicated region
      $region45: #{tpu_custom_call.1} parent=5 // pred_check
        %p342 = pneg %p341
      $region46: #{tpu_custom_call.1} parent=5 // pred_check_branch
        %344 = sbr.rel (%p342) target = $region48
      $region47: #{tpu_custom_call.1} parent=5 // pred_region
        // Predicated region
        $region49: #{tpu_custom_call.1} parent=47 // pred_check
          %p345 = pneg %p46
        $region50: #{tpu_custom_call.1} parent=47 // pred_check_branch
          %347 = sbr.rel (%p345) target = $region52
        $region51: #{tpu_custom_call.1} parent=47 // pred_region
          %s348 = sand.u32 %s36, 1
          %s349 = scalar_lea.sflag [#allocation3], %s348
          %s350 = sand.u32 %s36, 1
          %s351 = smul.addr %s350, 16
          %s352 = scalar_lea.vmem [#allocation2], %s351
          %s353 = smul.u32 2, %s26
          %s355 = ssub.s32 256, 256
          %356 = vsyncadd %s349, %s355
          %s357 = smul.addr %s353, 128
          %s358 = scalar_lea.hbm %s0, %s357
          %s359 = sshll.u32 %s352, 4
          %s360 = int_to_ptr.vmem [resolvable:$true] %s359
          %365 = dma.hbm_to_vmem [thread:$0]  %s358, 256, %s360, %s349, 128, 128, 8
        $region52: #{tpu_custom_call.1} parent=47 // pred_fallthru
          _
        // Predicated region
        $region53: #{tpu_custom_call.1} parent=47 // pred_check
          %p366 = pneg %p72
        $region54: #{tpu_custom_call.1} parent=47 // pred_check_branch
          %368 = sbr.rel (%p366) target = $region56
        $region55: #{tpu_custom_call.1} parent=47 // pred_region
          %s369 = sand.u32 %s26, 1
          %s370 = scalar_lea.sflag [#allocation6], %s369
          %s371 = sand.u32 %s62, 1
          %s372 = smul.addr %s371, 16
          %s373 = scalar_lea.vmem [#allocation5], %s372
          %s374 = smul.u32 2, %s26
          %s376 = ssub.s32 256, 256
          %377 = vsyncadd %s370, %s376
          %s378 = smul.addr %s374, 128
          %s379 = scalar_lea.hbm %s1, %s378
          %s380 = sshll.u32 %s373, 4
          %s381 = int_to_ptr.vmem [resolvable:$true] %s380
          %386 = dma.hbm_to_vmem [thread:$0]  %s379, 256, %s381, %s370, 128, 128, 8
        $region56: #{tpu_custom_call.1} parent=47 // pred_fallthru
          _
      $region48: #{tpu_custom_call.1} parent=5 // pred_fallthru
        _
      %p387 = scmp.le.s32.totalorder 1, %s26
      %p388 = scmp.lt.s32.totalorder %s26, 3
      %p389 = pnand %p387, %p388
      %p390 = pneg %p389
      // Predicated region
      $region57: #{tpu_custom_call.1} parent=5 // pred_check
        _
      $region58: #{tpu_custom_call.1} parent=5 // pred_check_branch
        %392 = sbr.rel (%p389) target = $region60
      $region59: #{tpu_custom_call.1} parent=5 // pred_region
        %s393 = ssub.s32 %s26, 1
        %s394 = sand.u32 %s39, 1
        %s395 = scalar_lea.sflag [#allocation3], %s394
        %s396 = sand.u32 %s39, 1
        %s397 = smul.addr %s396, 16
        %s398 = scalar_lea.vmem [#allocation2], %s397
        // Predicated region
        $region61: #{tpu_custom_call.1} parent=59 // pred_check
          %p399 = pneg %p52
        $region62: #{tpu_custom_call.1} parent=59 // pred_check_branch
          %401 = sbr.rel (%p399) target = $region64
        $region63: #{tpu_custom_call.1} parent=59 // pred_region
          %402 = dma.done %s395, 256
        $region64: #{tpu_custom_call.1} parent=59 // pred_fallthru
          _
        %s403 = sand.u32 %s31, 1
        %s404 = scalar_lea.sflag [#allocation6], %s403
        %s405 = sand.u32 %s65, 1
        %s406 = smul.addr %s405, 16
        %s407 = scalar_lea.vmem [#allocation5], %s406
        // Predicated region
        $region65: #{tpu_custom_call.1} parent=59 // pred_check
          %p408 = pneg %p78
        $region66: #{tpu_custom_call.1} parent=59 // pred_check_branch
          %410 = sbr.rel (%p408) target = $region68
        $region67: #{tpu_custom_call.1} parent=59 // pred_region
          %411 = dma.done %s404, 256
        $region68: #{tpu_custom_call.1} parent=59 // pred_fallthru
          _
        // Predicated region
        $region69: #{tpu_custom_call.1} parent=59 // pred_check
          %p412 = pneg %p99
        $region70: #{tpu_custom_call.1} parent=59 // pred_check_branch
          %414 = sbr.rel (%p412) target = $region72
        $region71: #{tpu_custom_call.1} parent=59 // pred_region
          %415 = dma.done [#allocation6], 512
        $region72: #{tpu_custom_call.1} parent=59 // pred_fallthru
          _
        // Predicated region
        $region73: #{tpu_custom_call.1} parent=59 // pred_check
          %p416 = pneg %p141
        $region74: #{tpu_custom_call.1} parent=59 // pred_check_branch
          %418 = sbr.rel (%p416) target = $region76
        $region75: #{tpu_custom_call.1} parent=59 // pred_region
          %419 = dma.done [#allocation9], 512
        $region76: #{tpu_custom_call.1} parent=59 // pred_fallthru
          _
        // Predicated region
        $region77: #{tpu_custom_call.1} parent=59 // pred_check
          %p420 = pneg %p183
        $region78: #{tpu_custom_call.1} parent=59 // pred_check_branch
          %422 = sbr.rel (%p420) target = $region80
        $region79: #{tpu_custom_call.1} parent=59 // pred_region
          %423 = dma.done [#allocation9], 512
        $region80: #{tpu_custom_call.1} parent=59 // pred_fallthru
          _
        %s424 = sand.u32 %s39, 1
        %s425 = scalar_lea.sflag [#allocation3], %s424
        %s426 = sand.u32 %s39, 1
        %s427 = smul.addr %s426, 16
        %s428 = scalar_lea.vmem [#allocation2], %s427
        %p429 = pneg %p52
        %p430 = pneg %p49
        %s431 = sand.u32 %s31, 1
        %s432 = scalar_lea.sflag [#allocation6], %s431
        %s433 = sand.u32 %s65, 1
        %s434 = smul.addr %s433, 16
        %s435 = scalar_lea.vmem [#allocation5], %s434
        %p436 = pneg %p78
        %p437 = pneg %p75
        %p438 = pneg %p99
        %p439 = pneg %p96
        %p440 = pneg %p120
        %p441 = pneg %p117
        %p442 = pneg %p141
        %p443 = pneg %p138
        %p444 = pneg %p162
        %p445 = pneg %p159
        %p446 = pneg %p183
        %p447 = pneg %p180
        %p448 = pneg %p204
        %p449 = pneg %p201
        %p450 = pneg %p225
        %p451 = pneg %p222
        %p452 = pneg %p246
        %p453 = pneg %p243
        %p454 = pneg %p272
        %p455 = pneg %p269
        %s456 = sand.u32 %s259, 1
        %s457 = scalar_lea.sflag [#allocation4], %s456
        %s458 = sand.u32 %s259, 1
        %s459 = smul.addr %s458, 16
        %s460 = scalar_lea.vmem [#allocation11], %s459
        %s461 = smul.u32 2, %s31
        %s462 = smul.u32 2, %s31
        %s463 = smul.u32 2, %s31
        %v464 = vld [vmem:[%s398] sm:$0xff]
        %v465 = vld [vmem:[%s398 + $0x8] sm:$0xff]
        %v466 = vld [vmem:[%s407] sm:$0xff]
        %v467 = vld [vmem:[%s407 + $0x8] sm:$0xff]
        %v468 = vld [vmem:[#allocation7] sm:$0xff]
        %v469 = vld [vmem:[#allocation7 + $0x8] sm:$0xff]
        %v470 = vld [vmem:[#allocation7 + $0x10] sm:$0xff]
        %v471 = vld [vmem:[#allocation7 + $0x18] sm:$0xff]
        %v472 = vld [vmem:[%s3] sm:$0x1]
        %v474 = vlaneseq
        %v475 = vshrl.u32 %v474, 7
        %v476 = vsub.s32 0, %v475
        %v477 = vrot.slane %v472, %v476
        %vm479 = vcmask 261120
        %v481 = vsel %vm479, %v464, 0
        %v484 = vsel %vm479, %v465, 0
        %486 = vmatprep.subr.mxu0 0.0
        %487 = vmatpush1.msra.mxu0 %v468
        %488 = vmatprep.subr.mxu0 0.0
        %489 = vmatpush1.msra.mxu0 %v469
        %490 = vmatprep.subr.mxu0 0.0
        %491 = vmatpush1.msra.mxu0 %v470
        %492 = vmatprep.subr.mxu0 0.0
        %493 = vmatpush1.msra.mxu0 %v471
        %494 = vmatprep.subr.mxu0 0.0
        %495 = vmatpush1.msra.mxu0 0.0
        %496 = vmatprep.subr.mxu0 0.0
        %497 = vmatpush1.msra.mxu0 0.0
        %498 = vmatprep.subr.mxu0 0.0
        %499 = vmatpush1.msra.mxu0 0.0
        %500 = vmatprep.subr.mxu0 0.0
        %501 = vmatpush1.msra.mxu0 0.0
        %502 = vmatprep.subr.mxu0 0.0
        %503 = vmatpush1.msra.mxu0 0.0
        %504 = vmatprep.subr.mxu0 0.0
        %505 = vmatpush1.msra.mxu0 0.0
        %506 = vmatprep.subr.mxu0 0.0
        %507 = vmatpush1.msra.mxu0 0.0
        %508 = vmatprep.subr.mxu0 0.0
        %509 = vmatpush1.msra.mxu0 0.0
        %510 = vmatprep.subr.mxu0 0.0
        %511 = vmatpush1.msra.mxu0 0.0
        %512 = vmatprep.subr.mxu0 0.0
        %513 = vmatpush1.msra.mxu0 0.0
        %514 = vmatprep.subr.mxu0 0.0
        %515 = vmatpush1.msra.mxu0 0.0
        %516 = vmatprep.subr.mxu0 0.0
        %517 = vmatpush1.msra.mxu0 0.0
        %518 = vmatprep.subr.mxu0 0.0
        %519 = vmatpush1.msra.mxu0 0.0
        %520 = vmatprep.subr.mxu0 0.0
        %521 = vmatpush1.msra.mxu0 0.0
        %522 = vmatprep.subr.mxu0 0.0
        %523 = vmatpush1.msra.mxu0 0.0
        %524 = vmatprep.subr.mxu0 0.0
        %525 = vmatpush1.msra.mxu0 0.0
        %526 = vmatprep.subr.mxu0 0.0
        %527 = vmatpush1.msra.mxu0 0.0
        %528 = vmatprep.subr.mxu0 0.0
        %529 = vmatpush1.msra.mxu0 0.0
        %530 = vmatprep.subr.mxu0 0.0
        %531 = vmatpush1.msra.mxu0 0.0
        %532 = vmatprep.subr.mxu0 0.0
        %533 = vmatpush1.msra.mxu0 0.0
        %534 = vmatprep.subr.mxu0 0.0
        %535 = vmatpush1.msra.mxu0 0.0
        %536 = vmatprep.subr.mxu0 0.0
        %537 = vmatpush1.msra.mxu0 0.0
        %538 = vmatprep.subr.mxu0 0.0
        %539 = vmatpush1.msra.mxu0 0.0
        %540 = vmatprep.subr.mxu0 0.0
        %541 = vmatpush1.msra.mxu0 0.0
        %542 = vmatprep.subr.mxu0 0.0
        %543 = vmatpush1.msra.mxu0 0.0
        %544 = vmatprep.subr.mxu0 0.0
        %545 = vmatpush1.msra.mxu0 0.0
        %546 = vmatprep.subr.mxu0 0.0
        %547 = vmatpush1.msra.mxu0 0.0
        %548 = vmatprep.subr.mxu0 0.0
        %549 = vmatpush1.msra.mxu0 0.0
        %550 = vmatprep.mubr.f32.mxu0 0.0
        %551 = vmatmul.mubr.f32.gmra.mrb[0].mxu0 %v481
        %v552 = vpop.f32.mrb[0].mxu0
        %v553 = vadd.f32 %v477, %v552
        %v554 = vpop.f32.mrb[0].mxu0
        %555 = vmatprep.mubr.f32.mxu0 0.0
        %556 = vmatmul.mubr.f32.gmra.mrb[0].mxu0 %v484
        %v557 = vpop.f32.mrb[0].mxu0
        %v558 = vadd.f32 %v477, %v557
        %v559 = vpop.f32.mrb[0].mxu0
        %560 = vdwg.mxu0
        %v561 = vld [vmem:[#allocation8] sm:$0xff]
        %v562 = vld [vmem:[#allocation8 + $0x8] sm:$0xff]
        %v563 = vld [vmem:[#allocation8 + $0x10] sm:$0xff]
        %v564 = vld [vmem:[#allocation8 + $0x18] sm:$0xff]
        %v565 = vld [vmem:[%s5] sm:$0x1]
        %v567 = vlaneseq
        %v568 = vshrl.u32 %v567, 7
        %v569 = vsub.s32 0, %v568
        %v570 = vrot.slane %v565, %v569
        %v573 = vsel %vm479, %v466, 0
        %v576 = vsel %vm479, %v467, 0
        %578 = vmatprep.subr.mxu0 0.0
        %579 = vmatpush1.msra.mxu0 %v561
        %580 = vmatprep.subr.mxu0 0.0
        %581 = vmatpush1.msra.mxu0 %v562
        %582 = vmatprep.subr.mxu0 0.0
        %583 = vmatpush1.msra.mxu0 %v563
        %584 = vmatprep.subr.mxu0 0.0
        %585 = vmatpush1.msra.mxu0 %v564
        %586 = vmatprep.subr.mxu0 0.0
        %587 = vmatpush1.msra.mxu0 0.0
        %588 = vmatprep.subr.mxu0 0.0
        %589 = vmatpush1.msra.mxu0 0.0
        %590 = vmatprep.subr.mxu0 0.0
        %591 = vmatpush1.msra.mxu0 0.0
        %592 = vmatprep.subr.mxu0 0.0
        %593 = vmatpush1.msra.mxu0 0.0
        %594 = vmatprep.subr.mxu0 0.0
        %595 = vmatpush1.msra.mxu0 0.0
        %596 = vmatprep.subr.mxu0 0.0
        %597 = vmatpush1.msra.mxu0 0.0
        %598 = vmatprep.subr.mxu0 0.0
        %599 = vmatpush1.msra.mxu0 0.0
        %600 = vmatprep.subr.mxu0 0.0
        %601 = vmatpush1.msra.mxu0 0.0
        %602 = vmatprep.subr.mxu0 0.0
        %603 = vmatpush1.msra.mxu0 0.0
        %604 = vmatprep.subr.mxu0 0.0
        %605 = vmatpush1.msra.mxu0 0.0
        %606 = vmatprep.subr.mxu0 0.0
        %607 = vmatpush1.msra.mxu0 0.0
        %608 = vmatprep.subr.mxu0 0.0
        %609 = vmatpush1.msra.mxu0 0.0
        %610 = vmatprep.subr.mxu0 0.0
        %611 = vmatpush1.msra.mxu0 0.0
        %612 = vmatprep.subr.mxu0 0.0
        %613 = vmatpush1.msra.mxu0 0.0
        %614 = vmatprep.subr.mxu0 0.0
        %615 = vmatpush1.msra.mxu0 0.0
        %616 = vmatprep.subr.mxu0 0.0
        %617 = vmatpush1.msra.mxu0 0.0
        %618 = vmatprep.subr.mxu0 0.0
        %619 = vmatpush1.msra.mxu0 0.0
        %620 = vmatprep.subr.mxu0 0.0
        %621 = vmatpush1.msra.mxu0 0.0
        %622 = vmatprep.subr.mxu0 0.0
        %623 = vmatpush1.msra.mxu0 0.0
        %624 = vmatprep.subr.mxu0 0.0
        %625 = vmatpush1.msra.mxu0 0.0
        %626 = vmatprep.subr.mxu0 0.0
        %627 = vmatpush1.msra.mxu0 0.0
        %628 = vmatprep.subr.mxu0 0.0
        %629 = vmatpush1.msra.mxu0 0.0
        %630 = vmatprep.subr.mxu0 0.0
        %631 = vmatpush1.msra.mxu0 0.0
        %632 = vmatprep.subr.mxu0 0.0
        %633 = vmatpush1.msra.mxu0 0.0
        %634 = vmatprep.subr.mxu0 0.0
        %635 = vmatpush1.msra.mxu0 0.0
        %636 = vmatprep.subr.mxu0 0.0
        %637 = vmatpush1.msra.mxu0 0.0
        %638 = vmatprep.subr.mxu0 0.0
        %639 = vmatpush1.msra.mxu0 0.0
        %640 = vmatprep.subr.mxu0 0.0
        %641 = vmatpush1.msra.mxu0 0.0
        %642 = vmatprep.mubr.f32.mxu0 0.0
        %643 = vmatmul.mubr.f32.gmra.mrb[0].mxu0 %v573
        %v644 = vpop.f32.mrb[0].mxu0
        %v645 = vadd.f32 %v570, %v644
        %v646 = vpop.f32.mrb[0].mxu0
        %647 = vmatprep.mubr.f32.mxu0 0.0
        %648 = vmatmul.mubr.f32.gmra.mrb[0].mxu0 %v576
        %v649 = vpop.f32.mrb[0].mxu0
        %v650 = vadd.f32 %v570, %v649
        %v651 = vpop.f32.mrb[0].mxu0
        %652 = vdwg.mxu0
        %v653 = vmul.f32 %v553, 0.35355338
        %v654 = vmul.f32 %v558, 0.35355338
        %vm655 = vcmask 64512
        %v657 = vsel %vm655, %v653, 0
        %v660 = vsel %vm655, %v654, 0
        %v663 = vsel %vm655, %v645, 0
        %v666 = vsel %vm655, %v650, 0
        %668 = vmatprep.subr.mxu0 0.0
        %669 = vmatpush1.xpose.msra.mxu0 %v663
        %670 = vmatprep.subr.mxu0 0.0
        %671 = vmatpush1.xpose.msra.mxu0 %v666
        %672 = vmatprep.subr.mxu0 0.0
        %673 = vmatpush1.xpose.msra.mxu0 0.0
        %674 = vmatprep.subr.mxu0 0.0
        %675 = vmatpush1.xpose.msra.mxu0 0.0
        %676 = vmatprep.subr.mxu0 0.0
        %677 = vmatpush1.xpose.msra.mxu0 0.0
        %678 = vmatprep.subr.mxu0 0.0
        %679 = vmatpush1.xpose.msra.mxu0 0.0
        %680 = vmatprep.subr.mxu0 0.0
        %681 = vmatpush1.xpose.msra.mxu0 0.0
        %682 = vmatprep.subr.mxu0 0.0
        %683 = vmatpush1.xpose.msra.mxu0 0.0
        %684 = vmatprep.subr.mxu0 0.0
        %685 = vmatpush1.xpose.msra.mxu0 0.0
        %686 = vmatprep.subr.mxu0 0.0
        %687 = vmatpush1.xpose.msra.mxu0 0.0
        %688 = vmatprep.subr.mxu0 0.0
        %689 = vmatpush1.xpose.msra.mxu0 0.0
        %690 = vmatprep.subr.mxu0 0.0
        %691 = vmatpush1.xpose.msra.mxu0 0.0
        %692 = vmatprep.subr.mxu0 0.0
        %693 = vmatpush1.xpose.msra.mxu0 0.0
        %694 = vmatprep.subr.mxu0 0.0
        %695 = vmatpush1.xpose.msra.mxu0 0.0
        %696 = vmatprep.subr.mxu0 0.0
        %697 = vmatpush1.xpose.msra.mxu0 0.0
        %698 = vmatprep.subr.mxu0 0.0
        %699 = vmatpush1.xpose.msra.mxu0 0.0
        %700 = vmatprep.subr.mxu0 0.0
        %701 = vmatpush1.xpose.msra.mxu0 0.0
        %702 = vmatprep.subr.mxu0 0.0
        %703 = vmatpush1.xpose.msra.mxu0 0.0
        %704 = vmatprep.subr.mxu0 0.0
        %705 = vmatpush1.xpose.msra.mxu0 0.0
        %706 = vmatprep.subr.mxu0 0.0
        %707 = vmatpush1.xpose.msra.mxu0 0.0
        %708 = vmatprep.subr.mxu0 0.0
        %709 = vmatpush1.xpose.msra.mxu0 0.0
        %710 = vmatprep.subr.mxu0 0.0
        %711 = vmatpush1.xpose.msra.mxu0 0.0
        %712 = vmatprep.subr.mxu0 0.0
        %713 = vmatpush1.xpose.msra.mxu0 0.0
        %714 = vmatprep.subr.mxu0 0.0
        %715 = vmatpush1.xpose.msra.mxu0 0.0
        %716 = vmatprep.subr.mxu0 0.0
        %717 = vmatpush1.xpose.msra.mxu0 0.0
        %718 = vmatprep.subr.mxu0 0.0
        %719 = vmatpush1.xpose.msra.mxu0 0.0
        %720 = vmatprep.subr.mxu0 0.0
        %721 = vmatpush1.xpose.msra.mxu0 0.0
        %722 = vmatprep.subr.mxu0 0.0
        %723 = vmatpush1.xpose.msra.mxu0 0.0
        %724 = vmatprep.subr.mxu0 0.0
        %725 = vmatpush1.xpose.msra.mxu0 0.0
        %726 = vmatprep.subr.mxu0 0.0
        %727 = vmatpush1.xpose.msra.mxu0 0.0
        %728 = vmatprep.subr.mxu0 0.0
        %729 = vmatpush1.xpose.msra.mxu0 0.0
        %730 = vmatprep.subr.mxu0 0.0
        %731 = vmatpush1.xpose.msra.mxu0 0.0
        %732 = vmatprep.mubr.f32.mxu0 0.0
        %733 = vmatmul.mubr.f32.gmra.mrb[0].mxu0 %v657
        %v734 = vpop.f32.mrb[0].mxu0
        %v735 = vadd.f32 0.0, %v734
        %v736 = vpop.f32.mrb[0].mxu0
        %737 = vmatprep.mubr.f32.mxu0 0.0
        %738 = vmatmul.mubr.f32.gmra.mrb[0].mxu0 %v660
        %v739 = vpop.f32.mrb[0].mxu0
        %v740 = vadd.f32 0.0, %v739
        %v741 = vpop.f32.mrb[0].mxu0
        %742 = vdwg.mxu0
        %vm743 = vcmask 130048
        %v744 = vsel %vm743, %v735, -inf
        %745 = vmax.xlane.f32.xlu0 %v744
        %v746 = vpop.xlane.xlu0 %745
        %v747 = vsel %vm743, %v740, -inf
        %748 = vmax.xlane.f32.xlu0 %v747
        %v749 = vpop.xlane.xlu0 %748
        %v750 = vsub.f32 %v735, %v746
        %v751 = vsub.f32 %v740, %v749
        %v752 = vmul.f32 %v750, 1.442695
        %v753 = vpow.pop %v752
        %v754 = vmul.f32 %v751, 1.442695
        %v755 = vpow.pop %v754
        %v756 = vsel %vm743, %v753, 0.0
        %757 = vadd.xlane.f32.xlu0 %v756
        %v758 = vpop.xlane.xlu0 %757
        %v759 = vsel %vm743, %v755, 0.0
        %760 = vadd.xlane.f32.xlu0 %v759
        %v761 = vpop.xlane.xlu0 %760
        %v762 = vrcp.pop %v758
        %v763 = vrcp.pop %v761
        %764 = vrot.lane.b32.xlu0 %v645, 96
        %v765 = vpop.permute.xlu0 %764
        %766 = vrot.lane.b32.xlu0 %v650, 96
        %v767 = vpop.permute.xlu0 %766
        %v771 = vsel %vm743, %v753, 0
        %v774 = vsel %vm743, %v755, 0
        %776 = vmatprep.subr.mxu0 0.0
        %777 = vmatpush1.msra.mxu0 %v765
        %778 = vmatprep.subr.mxu0 0.0
        %779 = vmatpush1.msra.mxu0 %v767
        %780 = vmatprep.subr.mxu0 0.0
        %781 = vmatpush1.msra.mxu0 0.0
        %782 = vmatprep.subr.mxu0 0.0
        %783 = vmatpush1.msra.mxu0 0.0
        %784 = vmatprep.subr.mxu0 0.0
        %785 = vmatpush1.msra.mxu0 0.0
        %786 = vmatprep.subr.mxu0 0.0
        %787 = vmatpush1.msra.mxu0 0.0
        %788 = vmatprep.subr.mxu0 0.0
        %789 = vmatpush1.msra.mxu0 0.0
        %790 = vmatprep.subr.mxu0 0.0
        %791 = vmatpush1.msra.mxu0 0.0
        %792 = vmatprep.subr.mxu0 0.0
        %793 = vmatpush1.msra.mxu0 0.0
        %794 = vmatprep.subr.mxu0 0.0
        %795 = vmatpush1.msra.mxu0 0.0
        %796 = vmatprep.subr.mxu0 0.0
        %797 = vmatpush1.msra.mxu0 0.0
        %798 = vmatprep.subr.mxu0 0.0
        %799 = vmatpush1.msra.mxu0 0.0
        %800 = vmatprep.subr.mxu0 0.0
        %801 = vmatpush1.msra.mxu0 0.0
        %802 = vmatprep.subr.mxu0 0.0
        %803 = vmatpush1.msra.mxu0 0.0
        %804 = vmatprep.subr.mxu0 0.0
        %805 = vmatpush1.msra.mxu0 0.0
        %806 = vmatprep.subr.mxu0 0.0
        %807 = vmatpush1.msra.mxu0 0.0
        %808 = vmatprep.subr.mxu0 0.0
        %809 = vmatpush1.msra.mxu0 0.0
        %810 = vmatprep.subr.mxu0 0.0
        %811 = vmatpush1.msra.mxu0 0.0
        %812 = vmatprep.subr.mxu0 0.0
        %813 = vmatpush1.msra.mxu0 0.0
        %814 = vmatprep.subr.mxu0 0.0
        %815 = vmatpush1.msra.mxu0 0.0
        %816 = vmatprep.subr.mxu0 0.0
        %817 = vmatpush1.msra.mxu0 0.0
        %818 = vmatprep.subr.mxu0 0.0
        %819 = vmatpush1.msra.mxu0 0.0
        %820 = vmatprep.subr.mxu0 0.0
        %821 = vmatpush1.msra.mxu0 0.0
        %822 = vmatprep.subr.mxu0 0.0
        %823 = vmatpush1.msra.mxu0 0.0
        %824 = vmatprep.subr.mxu0 0.0
        %825 = vmatpush1.msra.mxu0 0.0
        %826 = vmatprep.subr.mxu0 0.0
        %827 = vmatpush1.msra.mxu0 0.0
        %828 = vmatprep.subr.mxu0 0.0
        %829 = vmatpush1.msra.mxu0 0.0
        %830 = vmatprep.subr.mxu0 0.0
        %831 = vmatpush1.msra.mxu0 0.0
        %832 = vmatprep.subr.mxu0 0.0
        %833 = vmatpush1.msra.mxu0 0.0
        %834 = vmatprep.subr.mxu0 0.0
        %835 = vmatpush1.msra.mxu0 0.0
        %836 = vmatprep.subr.mxu0 0.0
        %837 = vmatpush1.msra.mxu0 0.0
        %838 = vmatprep.subr.mxu0 0.0
        %839 = vmatpush1.msra.mxu0 0.0
        %840 = vmatprep.mubr.f32.mxu0 0.0
        %841 = vmatmul.mubr.f32.gmra.mrb[0].mxu0 %v771
        %v842 = vpop.f32.mrb[0].mxu0
        %v843 = vadd.f32 0.0, %v842
        %v844 = vpop.f32.mrb[0].mxu0
        %845 = vmatprep.mubr.f32.mxu0 0.0
        %846 = vmatmul.mubr.f32.gmra.mrb[0].mxu0 %v774
        %v847 = vpop.f32.mrb[0].mxu0
        %v848 = vadd.f32 0.0, %v847
        %v849 = vpop.f32.mrb[0].mxu0
        %850 = vdwg.mxu0
        %v851 = vmul.f32 %v843, %v762
        %v852 = vmul.f32 %v848, %v763
        %v853 = vld [vmem:[#allocation10] sm:$0xff]
        %854 = vrot.lane.b32.xlu0 %v653, 120
        %v855 = vpop.permute.xlu0 %854
        %856 = vrot.lane.b32.xlu0 %v654, 120
        %v857 = vpop.permute.xlu0 %856
        %858 = vrot.lane.b32.xlu0 %v645, 120
        %v859 = vpop.permute.xlu0 %858
        %860 = vrot.lane.b32.xlu0 %v650, 120
        %v861 = vpop.permute.xlu0 %860
        %v862 = vsel %vm655, %v855, 0
        %v864 = vsel %vm655, %v857, 0
        %v866 = vsel %vm655, %v859, 0
        %v868 = vsel %vm655, %v861, 0
        %870 = vmatprep.subr.mxu0 0.0
        %871 = vmatpush1.xpose.msra.mxu0 %v866
        %872 = vmatprep.subr.mxu0 0.0
        %873 = vmatpush1.xpose.msra.mxu0 %v868
        %874 = vmatprep.subr.mxu0 0.0
        %875 = vmatpush1.xpose.msra.mxu0 0.0
        %876 = vmatprep.subr.mxu0 0.0
        %877 = vmatpush1.xpose.msra.mxu0 0.0
        %878 = vmatprep.subr.mxu0 0.0
        %879 = vmatpush1.xpose.msra.mxu0 0.0
        %880 = vmatprep.subr.mxu0 0.0
        %881 = vmatpush1.xpose.msra.mxu0 0.0
        %882 = vmatprep.subr.mxu0 0.0
        %883 = vmatpush1.xpose.msra.mxu0 0.0
        %884 = vmatprep.subr.mxu0 0.0
        %885 = vmatpush1.xpose.msra.mxu0 0.0
        %886 = vmatprep.subr.mxu0 0.0
        %887 = vmatpush1.xpose.msra.mxu0 0.0
        %888 = vmatprep.subr.mxu0 0.0
        %889 = vmatpush1.xpose.msra.mxu0 0.0
        %890 = vmatprep.subr.mxu0 0.0
        %891 = vmatpush1.xpose.msra.mxu0 0.0
        %892 = vmatprep.subr.mxu0 0.0
        %893 = vmatpush1.xpose.msra.mxu0 0.0
        %894 = vmatprep.subr.mxu0 0.0
        %895 = vmatpush1.xpose.msra.mxu0 0.0
        %896 = vmatprep.subr.mxu0 0.0
        %897 = vmatpush1.xpose.msra.mxu0 0.0
        %898 = vmatprep.subr.mxu0 0.0
        %899 = vmatpush1.xpose.msra.mxu0 0.0
        %900 = vmatprep.subr.mxu0 0.0
        %901 = vmatpush1.xpose.msra.mxu0 0.0
        %902 = vmatprep.subr.mxu0 0.0
        %903 = vmatpush1.xpose.msra.mxu0 0.0
        %904 = vmatprep.subr.mxu0 0.0
        %905 = vmatpush1.xpose.msra.mxu0 0.0
        %906 = vmatprep.subr.mxu0 0.0
        %907 = vmatpush1.xpose.msra.mxu0 0.0
        %908 = vmatprep.subr.mxu0 0.0
        %909 = vmatpush1.xpose.msra.mxu0 0.0
        %910 = vmatprep.subr.mxu0 0.0
        %911 = vmatpush1.xpose.msra.mxu0 0.0
        %912 = vmatprep.subr.mxu0 0.0
        %913 = vmatpush1.xpose.msra.mxu0 0.0
        %914 = vmatprep.subr.mxu0 0.0
        %915 = vmatpush1.xpose.msra.mxu0 0.0
        %916 = vmatprep.subr.mxu0 0.0
        %917 = vmatpush1.xpose.msra.mxu0 0.0
        %918 = vmatprep.subr.mxu0 0.0
        %919 = vmatpush1.xpose.msra.mxu0 0.0
        %920 = vmatprep.subr.mxu0 0.0
        %921 = vmatpush1.xpose.msra.mxu0 0.0
        %922 = vmatprep.subr.mxu0 0.0
        %923 = vmatpush1.xpose.msra.mxu0 0.0
        %924 = vmatprep.subr.mxu0 0.0
        %925 = vmatpush1.xpose.msra.mxu0 0.0
        %926 = vmatprep.subr.mxu0 0.0
        %927 = vmatpush1.xpose.msra.mxu0 0.0
        %928 = vmatprep.subr.mxu0 0.0
        %929 = vmatpush1.xpose.msra.mxu0 0.0
        %930 = vmatprep.subr.mxu0 0.0
        %931 = vmatpush1.xpose.msra.mxu0 0.0
        %932 = vmatprep.subr.mxu0 0.0
        %933 = vmatpush1.xpose.msra.mxu0 0.0
        %934 = vmatprep.mubr.f32.mxu0 0.0
        %935 = vmatmul.mubr.f32.gmra.mrb[0].mxu0 %v862
        %v936 = vpop.f32.mrb[0].mxu0
        %v937 = vadd.f32 0.0, %v936
        %v938 = vpop.f32.mrb[0].mxu0
        %939 = vmatprep.mubr.f32.mxu0 0.0
        %940 = vmatmul.mubr.f32.gmra.mrb[0].mxu0 %v864
        %v941 = vpop.f32.mrb[0].mxu0
        %v942 = vadd.f32 0.0, %v941
        %v943 = vpop.f32.mrb[0].mxu0
        %944 = vdwg.mxu0
        %v945 = vsel %vm743, %v937, -inf
        %946 = vmax.xlane.f32.xlu0 %v945
        %v947 = vpop.xlane.xlu0 %946
        %v948 = vsel %vm743, %v942, -inf
        %949 = vmax.xlane.f32.xlu0 %v948
        %v950 = vpop.xlane.xlu0 %949
        %v951 = vsub.f32 %v937, %v947
        %v952 = vsub.f32 %v942, %v950
        %v953 = vmul.f32 %v951, 1.442695
        %v954 = vpow.pop %v953
        %v955 = vmul.f32 %v952, 1.442695
        %v956 = vpow.pop %v955
        %v957 = vsel %vm743, %v954, 0.0
        %958 = vadd.xlane.f32.xlu0 %v957
        %v959 = vpop.xlane.xlu0 %958
        %v960 = vsel %vm743, %v956, 0.0
        %961 = vadd.xlane.f32.xlu0 %v960
        %v962 = vpop.xlane.xlu0 %961
        %v963 = vrcp.pop %v959
        %v964 = vrcp.pop %v962
        %965 = vrot.lane.b32.xlu0 %v645, 88
        %v966 = vpop.permute.xlu0 %965
        %967 = vrot.lane.b32.xlu0 %v650, 88
        %v968 = vpop.permute.xlu0 %967
        %v972 = vsel %vm743, %v954, 0
        %v975 = vsel %vm743, %v956, 0
        %977 = vmatprep.subr.mxu0 0.0
        %978 = vmatpush1.msra.mxu0 %v966
        %979 = vmatprep.subr.mxu0 0.0
        %980 = vmatpush1.msra.mxu0 %v968
        %981 = vmatprep.subr.mxu0 0.0
        %982 = vmatpush1.msra.mxu0 0.0
        %983 = vmatprep.subr.mxu0 0.0
        %984 = vmatpush1.msra.mxu0 0.0
        %985 = vmatprep.subr.mxu0 0.0
        %986 = vmatpush1.msra.mxu0 0.0
        %987 = vmatprep.subr.mxu0 0.0
        %988 = vmatpush1.msra.mxu0 0.0
        %989 = vmatprep.subr.mxu0 0.0
        %990 = vmatpush1.msra.mxu0 0.0
        %991 = vmatprep.subr.mxu0 0.0
        %992 = vmatpush1.msra.mxu0 0.0
        %993 = vmatprep.subr.mxu0 0.0
        %994 = vmatpush1.msra.mxu0 0.0
        %995 = vmatprep.subr.mxu0 0.0
        %996 = vmatpush1.msra.mxu0 0.0
        %997 = vmatprep.subr.mxu0 0.0
        %998 = vmatpush1.msra.mxu0 0.0
        %999 = vmatprep.subr.mxu0 0.0
        %1000 = vmatpush1.msra.mxu0 0.0
        %1001 = vmatprep.subr.mxu0 0.0
        %1002 = vmatpush1.msra.mxu0 0.0
        %1003 = vmatprep.subr.mxu0 0.0
        %1004 = vmatpush1.msra.mxu0 0.0
        %1005 = vmatprep.subr.mxu0 0.0
        %1006 = vmatpush1.msra.mxu0 0.0
        %1007 = vmatprep.subr.mxu0 0.0
        %1008 = vmatpush1.msra.mxu0 0.0
        %1009 = vmatprep.subr.mxu0 0.0
        %1010 = vmatpush1.msra.mxu0 0.0
        %1011 = vmatprep.subr.mxu0 0.0
        %1012 = vmatpush1.msra.mxu0 0.0
        %1013 = vmatprep.subr.mxu0 0.0
        %1014 = vmatpush1.msra.mxu0 0.0
        %1015 = vmatprep.subr.mxu0 0.0
        %1016 = vmatpush1.msra.mxu0 0.0
        %1017 = vmatprep.subr.mxu0 0.0
        %1018 = vmatpush1.msra.mxu0 0.0
        %1019 = vmatprep.subr.mxu0 0.0
        %1020 = vmatpush1.msra.mxu0 0.0
        %1021 = vmatprep.subr.mxu0 0.0
        %1022 = vmatpush1.msra.mxu0 0.0
        %1023 = vmatprep.subr.mxu0 0.0
        %1024 = vmatpush1.msra.mxu0 0.0
        %1025 = vmatprep.subr.mxu0 0.0
        %1026 = vmatpush1.msra.mxu0 0.0
        %1027 = vmatprep.subr.mxu0 0.0
        %1028 = vmatpush1.msra.mxu0 0.0
        %1029 = vmatprep.subr.mxu0 0.0
        %1030 = vmatpush1.msra.mxu0 0.0
        %1031 = vmatprep.subr.mxu0 0.0
        %1032 = vmatpush1.msra.mxu0 0.0
        %1033 = vmatprep.subr.mxu0 0.0
        %1034 = vmatpush1.msra.mxu0 0.0
        %1035 = vmatprep.subr.mxu0 0.0
        %1036 = vmatpush1.msra.mxu0 0.0
        %1037 = vmatprep.subr.mxu0 0.0
        %1038 = vmatpush1.msra.mxu0 0.0
        %1039 = vmatprep.subr.mxu0 0.0
        %1040 = vmatpush1.msra.mxu0 0.0
        %1041 = vmatprep.mubr.f32.mxu0 0.0
        %1042 = vmatmul.mubr.f32.gmra.mrb[0].mxu0 %v972
        %v1043 = vpop.f32.mrb[0].mxu0
        %v1044 = vadd.f32 0.0, %v1043
        %v1045 = vpop.f32.mrb[0].mxu0
        %1046 = vmatprep.mubr.f32.mxu0 0.0
        %1047 = vmatmul.mubr.f32.gmra.mrb[0].mxu0 %v975
        %v1048 = vpop.f32.mrb[0].mxu0
        %v1049 = vadd.f32 0.0, %v1048
        %v1050 = vpop.f32.mrb[0].mxu0
        %1051 = vdwg.mxu0
        %v1052 = vmul.f32 %v1044, %v963
        %v1053 = vmul.f32 %v1049, %v964
        %s1054 = scalar_lea.vmem [#allocation10], 8
        %v1055 = vld [vmem:[%s1054] sm:$0xff]
        %v1057 = vsel %vm655, %v1052, 0
        %v1060 = vsel %vm655, %v1053, 0
        %1062 = vmatprep.subr.mxu0 0.0
        %1063 = vmatpush1.msra.mxu0 %v1055
        %1064 = vmatprep.subr.mxu0 0.0
        %1065 = vmatpush1.msra.mxu0 0.0
        %1066 = vmatprep.subr.mxu0 0.0
        %1067 = vmatpush1.msra.mxu0 0.0
        %1068 = vmatprep.subr.mxu0 0.0
        %1069 = vmatpush1.msra.mxu0 0.0
        %1070 = vmatprep.subr.mxu0 0.0
        %1071 = vmatpush1.msra.mxu0 0.0
        %1072 = vmatprep.subr.mxu0 0.0
        %1073 = vmatpush1.msra.mxu0 0.0
        %1074 = vmatprep.subr.mxu0 0.0
        %1075 = vmatpush1.msra.mxu0 0.0
        %1076 = vmatprep.subr.mxu0 0.0
        %1077 = vmatpush1.msra.mxu0 0.0
        %1078 = vmatprep.subr.mxu0 0.0
        %1079 = vmatpush1.msra.mxu0 0.0
        %1080 = vmatprep.subr.mxu0 0.0
        %1081 = vmatpush1.msra.mxu0 0.0
        %1082 = vmatprep.subr.mxu0 0.0
        %1083 = vmatpush1.msra.mxu0 0.0
        %1084 = vmatprep.subr.mxu0 0.0
        %1085 = vmatpush1.msra.mxu0 0.0
        %1086 = vmatprep.subr.mxu0 0.0
        %1087 = vmatpush1.msra.mxu0 0.0
        %1088 = vmatprep.subr.mxu0 0.0
        %1089 = vmatpush1.msra.mxu0 0.0
        %1090 = vmatprep.subr.mxu0 0.0
        %1091 = vmatpush1.msra.mxu0 0.0
        %1092 = vmatprep.subr.mxu0 0.0
        %1093 = vmatpush1.msra.mxu0 0.0
        %1094 = vmatprep.subr.mxu0 0.0
        %1095 = vmatpush1.msra.mxu0 0.0
        %1096 = vmatprep.subr.mxu0 0.0
        %1097 = vmatpush1.msra.mxu0 0.0
        %1098 = vmatprep.subr.mxu0 0.0
        %1099 = vmatpush1.msra.mxu0 0.0
        %1100 = vmatprep.subr.mxu0 0.0
        %1101 = vmatpush1.msra.mxu0 0.0
        %1102 = vmatprep.subr.mxu0 0.0
        %1103 = vmatpush1.msra.mxu0 0.0
        %1104 = vmatprep.subr.mxu0 0.0
        %1105 = vmatpush1.msra.mxu0 0.0
        %1106 = vmatprep.subr.mxu0 0.0
        %1107 = vmatpush1.msra.mxu0 0.0
        %1108 = vmatprep.subr.mxu0 0.0
        %1109 = vmatpush1.msra.mxu0 0.0
        %1110 = vmatprep.subr.mxu0 0.0
        %1111 = vmatpush1.msra.mxu0 0.0
        %1112 = vmatprep.subr.mxu0 0.0
        %1113 = vmatpush1.msra.mxu0 0.0
        %1114 = vmatprep.subr.mxu0 0.0
        %1115 = vmatpush1.msra.mxu0 0.0
        %1116 = vmatprep.subr.mxu0 0.0
        %1117 = vmatpush1.msra.mxu0 0.0
        %1118 = vmatprep.subr.mxu0 0.0
        %1119 = vmatpush1.msra.mxu0 0.0
        %1120 = vmatprep.subr.mxu0 0.0
        %1121 = vmatpush1.msra.mxu0 0.0
        %1122 = vmatprep.subr.mxu0 0.0
        %1123 = vmatpush1.msra.mxu0 0.0
        %1124 = vmatprep.subr.mxu0 0.0
        %1125 = vmatpush1.msra.mxu0 0.0
        %1126 = vmatprep.mubr.f32.mxu0 0.0
        %1127 = vmatmul.mubr.f32.gmra.mrb[0].mxu0 %v1057
        %v1128 = vpop.f32.mrb[0].mxu0
        %v1129 = vadd.f32 0.0, %v1128
        %v1130 = vpop.f32.mrb[0].mxu0
        %1131 = vmatprep.mubr.f32.mxu0 0.0
        %1132 = vmatmul.mubr.f32.gmra.mrb[0].mxu0 %v1060
        %v1133 = vpop.f32.mrb[0].mxu0
        %v1134 = vadd.f32 0.0, %v1133
        %v1135 = vpop.f32.mrb[0].mxu0
        %1136 = vdwg.mxu0
        %v1138 = vsel %vm655, %v851, 0
        %v1141 = vsel %vm655, %v852, 0
        %1143 = vmatprep.subr.mxu0 0.0
        %1144 = vmatpush1.msra.mxu0 %v853
        %1145 = vmatprep.subr.mxu0 0.0
        %1146 = vmatpush1.msra.mxu0 0.0
        %1147 = vmatprep.subr.mxu0 0.0
        %1148 = vmatpush1.msra.mxu0 0.0
        %1149 = vmatprep.subr.mxu0 0.0
        %1150 = vmatpush1.msra.mxu0 0.0
        %1151 = vmatprep.subr.mxu0 0.0
        %1152 = vmatpush1.msra.mxu0 0.0
        %1153 = vmatprep.subr.mxu0 0.0
        %1154 = vmatpush1.msra.mxu0 0.0
        %1155 = vmatprep.subr.mxu0 0.0
        %1156 = vmatpush1.msra.mxu0 0.0
        %1157 = vmatprep.subr.mxu0 0.0
        %1158 = vmatpush1.msra.mxu0 0.0
        %1159 = vmatprep.subr.mxu0 0.0
        %1160 = vmatpush1.msra.mxu0 0.0
        %1161 = vmatprep.subr.mxu0 0.0
        %1162 = vmatpush1.msra.mxu0 0.0
        %1163 = vmatprep.subr.mxu0 0.0
        %1164 = vmatpush1.msra.mxu0 0.0
        %1165 = vmatprep.subr.mxu0 0.0
        %1166 = vmatpush1.msra.mxu0 0.0
        %1167 = vmatprep.subr.mxu0 0.0
        %1168 = vmatpush1.msra.mxu0 0.0
        %1169 = vmatprep.subr.mxu0 0.0
        %1170 = vmatpush1.msra.mxu0 0.0
        %1171 = vmatprep.subr.mxu0 0.0
        %1172 = vmatpush1.msra.mxu0 0.0
        %1173 = vmatprep.subr.mxu0 0.0
        %1174 = vmatpush1.msra.mxu0 0.0
        %1175 = vmatprep.subr.mxu0 0.0
        %1176 = vmatpush1.msra.mxu0 0.0
        %1177 = vmatprep.subr.mxu0 0.0
        %1178 = vmatpush1.msra.mxu0 0.0
        %1179 = vmatprep.subr.mxu0 0.0
        %1180 = vmatpush1.msra.mxu0 0.0
        %1181 = vmatprep.subr.mxu0 0.0
        %1182 = vmatpush1.msra.mxu0 0.0
        %1183 = vmatprep.subr.mxu0 0.0
        %1184 = vmatpush1.msra.mxu0 0.0
        %1185 = vmatprep.subr.mxu0 0.0
        %1186 = vmatpush1.msra.mxu0 0.0
        %1187 = vmatprep.subr.mxu0 0.0
        %1188 = vmatpush1.msra.mxu0 0.0
        %1189 = vmatprep.subr.mxu0 0.0
        %1190 = vmatpush1.msra.mxu0 0.0
        %1191 = vmatprep.subr.mxu0 0.0
        %1192 = vmatpush1.msra.mxu0 0.0
        %1193 = vmatprep.subr.mxu0 0.0
        %1194 = vmatpush1.msra.mxu0 0.0
        %1195 = vmatprep.subr.mxu0 0.0
        %1196 = vmatpush1.msra.mxu0 0.0
        %1197 = vmatprep.subr.mxu0 0.0
        %1198 = vmatpush1.msra.mxu0 0.0
        %1199 = vmatprep.subr.mxu0 0.0
        %1200 = vmatpush1.msra.mxu0 0.0
        %1201 = vmatprep.subr.mxu0 0.0
        %1202 = vmatpush1.msra.mxu0 0.0
        %1203 = vmatprep.subr.mxu0 0.0
        %1204 = vmatpush1.msra.mxu0 0.0
        %1205 = vmatprep.subr.mxu0 0.0
        %1206 = vmatpush1.msra.mxu0 0.0
        %1207 = vmatprep.mubr.f32.mxu0 0.0
        %1208 = vmatmul.mubr.f32.gmra.mrb[0].mxu0 %v1138
        %v1209 = vpop.f32.mrb[0].mxu0
        %v1210 = vadd.f32 %v1129, %v1209
        %v1211 = vpop.f32.mrb[0].mxu0
        %1212 = vmatprep.mubr.f32.mxu0 0.0
        %1213 = vmatmul.mubr.f32.gmra.mrb[0].mxu0 %v1141
        %v1214 = vpop.f32.mrb[0].mxu0
        %v1215 = vadd.f32 %v1134, %v1214
        %v1216 = vpop.f32.mrb[0].mxu0
        %1217 = vdwg.mxu0
        %1218 = vrot.lane.b32.xlu0 %v653, 112
        %v1219 = vpop.permute.xlu0 %1218
        %1220 = vrot.lane.b32.xlu0 %v654, 112
        %v1221 = vpop.permute.xlu0 %1220
        %1222 = vrot.lane.b32.xlu0 %v645, 112
        %v1223 = vpop.permute.xlu0 %1222
        %1224 = vrot.lane.b32.xlu0 %v650, 112
        %v1225 = vpop.permute.xlu0 %1224
        %v1226 = vsel %vm655, %v1219, 0
        %v1228 = vsel %vm655, %v1221, 0
        %v1230 = vsel %vm655, %v1223, 0
        %v1232 = vsel %vm655, %v1225, 0
        %1234 = vmatprep.subr.mxu0 0.0
        %1235 = vmatpush1.xpose.msra.mxu0 %v1230
        %1236 = vmatprep.subr.mxu0 0.0
        %1237 = vmatpush1.xpose.msra.mxu0 %v1232
        %1238 = vmatprep.subr.mxu0 0.0
        %1239 = vmatpush1.xpose.msra.mxu0 0.0
        %1240 = vmatprep.subr.mxu0 0.0
        %1241 = vmatpush1.xpose.msra.mxu0 0.0
        %1242 = vmatprep.subr.mxu0 0.0
        %1243 = vmatpush1.xpose.msra.mxu0 0.0
        %1244 = vmatprep.subr.mxu0 0.0
        %1245 = vmatpush1.xpose.msra.mxu0 0.0
        %1246 = vmatprep.subr.mxu0 0.0
        %1247 = vmatpush1.xpose.msra.mxu0 0.0
        %1248 = vmatprep.subr.mxu0 0.0
        %1249 = vmatpush1.xpose.msra.mxu0 0.0
        %1250 = vmatprep.subr.mxu0 0.0
        %1251 = vmatpush1.xpose.msra.mxu0 0.0
        %1252 = vmatprep.subr.mxu0 0.0
        %1253 = vmatpush1.xpose.msra.mxu0 0.0
        %1254 = vmatprep.subr.mxu0 0.0
        %1255 = vmatpush1.xpose.msra.mxu0 0.0
        %1256 = vmatprep.subr.mxu0 0.0
        %1257 = vmatpush1.xpose.msra.mxu0 0.0
        %1258 = vmatprep.subr.mxu0 0.0
        %1259 = vmatpush1.xpose.msra.mxu0 0.0
        %1260 = vmatprep.subr.mxu0 0.0
        %1261 = vmatpush1.xpose.msra.mxu0 0.0
        %1262 = vmatprep.subr.mxu0 0.0
        %1263 = vmatpush1.xpose.msra.mxu0 0.0
        %1264 = vmatprep.subr.mxu0 0.0
        %1265 = vmatpush1.xpose.msra.mxu0 0.0
        %1266 = vmatprep.subr.mxu0 0.0
        %1267 = vmatpush1.xpose.msra.mxu0 0.0
        %1268 = vmatprep.subr.mxu0 0.0
        %1269 = vmatpush1.xpose.msra.mxu0 0.0
        %1270 = vmatprep.subr.mxu0 0.0
        %1271 = vmatpush1.xpose.msra.mxu0 0.0
        %1272 = vmatprep.subr.mxu0 0.0
        %1273 = vmatpush1.xpose.msra.mxu0 0.0
        %1274 = vmatprep.subr.mxu0 0.0
        %1275 = vmatpush1.xpose.msra.mxu0 0.0
        %1276 = vmatprep.subr.mxu0 0.0
        %1277 = vmatpush1.xpose.msra.mxu0 0.0
        %1278 = vmatprep.subr.mxu0 0.0
        %1279 = vmatpush1.xpose.msra.mxu0 0.0
        %1280 = vmatprep.subr.mxu0 0.0
        %1281 = vmatpush1.xpose.msra.mxu0 0.0
        %1282 = vmatprep.subr.mxu0 0.0
        %1283 = vmatpush1.xpose.msra.mxu0 0.0
        %1284 = vmatprep.subr.mxu0 0.0
        %1285 = vmatpush1.xpose.msra.mxu0 0.0
        %1286 = vmatprep.subr.mxu0 0.0
        %1287 = vmatpush1.xpose.msra.mxu0 0.0
        %1288 = vmatprep.subr.mxu0 0.0
        %1289 = vmatpush1.xpose.msra.mxu0 0.0
        %1290 = vmatprep.subr.mxu0 0.0
        %1291 = vmatpush1.xpose.msra.mxu0 0.0
        %1292 = vmatprep.subr.mxu0 0.0
        %1293 = vmatpush1.xpose.msra.mxu0 0.0
        %1294 = vmatprep.subr.mxu0 0.0
        %1295 = vmatpush1.xpose.msra.mxu0 0.0
        %1296 = vmatprep.subr.mxu0 0.0
        %1297 = vmatpush1.xpose.msra.mxu0 0.0
        %1298 = vmatprep.mubr.f32.mxu0 0.0
        %1299 = vmatmul.mubr.f32.gmra.mrb[0].mxu0 %v1226
        %v1300 = vpop.f32.mrb[0].mxu0
        %v1301 = vadd.f32 0.0, %v1300
        %v1302 = vpop.f32.mrb[0].mxu0
        %1303 = vmatprep.mubr.f32.mxu0 0.0
        %1304 = vmatmul.mubr.f32.gmra.mrb[0].mxu0 %v1228
        %v1305 = vpop.f32.mrb[0].mxu0
        %v1306 = vadd.f32 0.0, %v1305
        %v1307 = vpop.f32.mrb[0].mxu0
        %1308 = vdwg.mxu0
        %v1309 = vsel %vm743, %v1301, -inf
        %1310 = vmax.xlane.f32.xlu0 %v1309
        %v1311 = vpop.xlane.xlu0 %1310
        %v1312 = vsel %vm743, %v1306, -inf
        %1313 = vmax.xlane.f32.xlu0 %v1312
        %v1314 = vpop.xlane.xlu0 %1313
        %v1315 = vsub.f32 %v1301, %v1311
        %v1316 = vsub.f32 %v1306, %v1314
        %v1317 = vmul.f32 %v1315, 1.442695
        %v1318 = vpow.pop %v1317
        %v1319 = vmul.f32 %v1316, 1.442695
        %v1320 = vpow.pop %v1319
        %v1321 = vsel %vm743, %v1318, 0.0
        %1322 = vadd.xlane.f32.xlu0 %v1321
        %v1323 = vpop.xlane.xlu0 %1322
        %v1324 = vsel %vm743, %v1320, 0.0
        %1325 = vadd.xlane.f32.xlu0 %v1324
        %v1326 = vpop.xlane.xlu0 %1325
        %v1327 = vrcp.pop %v1323
        %v1328 = vrcp.pop %v1326
        %1329 = vrot.lane.b32.xlu0 %v645, 80
        %v1330 = vpop.permute.xlu0 %1329
        %1331 = vrot.lane.b32.xlu0 %v650, 80
        %v1332 = vpop.permute.xlu0 %1331
        %v1336 = vsel %vm743, %v1318, 0
        %v1339 = vsel %vm743, %v1320, 0
        %1341 = vmatprep.subr.mxu0 0.0
        %1342 = vmatpush1.msra.mxu0 %v1330
        %1343 = vmatprep.subr.mxu0 0.0
        %1344 = vmatpush1.msra.mxu0 %v1332
        %1345 = vmatprep.subr.mxu0 0.0
        %1346 = vmatpush1.msra.mxu0 0.0
        %1347 = vmatprep.subr.mxu0 0.0
        %1348 = vmatpush1.msra.mxu0 0.0
        %1349 = vmatprep.subr.mxu0 0.0
        %1350 = vmatpush1.msra.mxu0 0.0
        %1351 = vmatprep.subr.mxu0 0.0
        %1352 = vmatpush1.msra.mxu0 0.0
        %1353 = vmatprep.subr.mxu0 0.0
        %1354 = vmatpush1.msra.mxu0 0.0
        %1355 = vmatprep.subr.mxu0 0.0
        %1356 = vmatpush1.msra.mxu0 0.0
        %1357 = vmatprep.subr.mxu0 0.0
        %1358 = vmatpush1.msra.mxu0 0.0
        %1359 = vmatprep.subr.mxu0 0.0
        %1360 = vmatpush1.msra.mxu0 0.0
        %1361 = vmatprep.subr.mxu0 0.0
        %1362 = vmatpush1.msra.mxu0 0.0
        %1363 = vmatprep.subr.mxu0 0.0
        %1364 = vmatpush1.msra.mxu0 0.0
        %1365 = vmatprep.subr.mxu0 0.0
        %1366 = vmatpush1.msra.mxu0 0.0
        %1367 = vmatprep.subr.mxu0 0.0
        %1368 = vmatpush1.msra.mxu0 0.0
        %1369 = vmatprep.subr.mxu0 0.0
        %1370 = vmatpush1.msra.mxu0 0.0
        %1371 = vmatprep.subr.mxu0 0.0
        %1372 = vmatpush1.msra.mxu0 0.0
        %1373 = vmatprep.subr.mxu0 0.0
        %1374 = vmatpush1.msra.mxu0 0.0
        %1375 = vmatprep.subr.mxu0 0.0
        %1376 = vmatpush1.msra.mxu0 0.0
        %1377 = vmatprep.subr.mxu0 0.0
        %1378 = vmatpush1.msra.mxu0 0.0
        %1379 = vmatprep.subr.mxu0 0.0
        %1380 = vmatpush1.msra.mxu0 0.0
        %1381 = vmatprep.subr.mxu0 0.0
        %1382 = vmatpush1.msra.mxu0 0.0
        %1383 = vmatprep.subr.mxu0 0.0
        %1384 = vmatpush1.msra.mxu0 0.0
        %1385 = vmatprep.subr.mxu0 0.0
        %1386 = vmatpush1.msra.mxu0 0.0
        %1387 = vmatprep.subr.mxu0 0.0
        %1388 = vmatpush1.msra.mxu0 0.0
        %1389 = vmatprep.subr.mxu0 0.0
        %1390 = vmatpush1.msra.mxu0 0.0
        %1391 = vmatprep.subr.mxu0 0.0
        %1392 = vmatpush1.msra.mxu0 0.0
        %1393 = vmatprep.subr.mxu0 0.0
        %1394 = vmatpush1.msra.mxu0 0.0
        %1395 = vmatprep.subr.mxu0 0.0
        %1396 = vmatpush1.msra.mxu0 0.0
        %1397 = vmatprep.subr.mxu0 0.0
        %1398 = vmatpush1.msra.mxu0 0.0
        %1399 = vmatprep.subr.mxu0 0.0
        %1400 = vmatpush1.msra.mxu0 0.0
        %1401 = vmatprep.subr.mxu0 0.0
        %1402 = vmatpush1.msra.mxu0 0.0
        %1403 = vmatprep.subr.mxu0 0.0
        %1404 = vmatpush1.msra.mxu0 0.0
        %1405 = vmatprep.mubr.f32.mxu0 0.0
        %1406 = vmatmul.mubr.f32.gmra.mrb[0].mxu0 %v1336
        %v1407 = vpop.f32.mrb[0].mxu0
        %v1408 = vadd.f32 0.0, %v1407
        %v1409 = vpop.f32.mrb[0].mxu0
        %1410 = vmatprep.mubr.f32.mxu0 0.0
        %1411 = vmatmul.mubr.f32.gmra.mrb[0].mxu0 %v1339
        %v1412 = vpop.f32.mrb[0].mxu0
        %v1413 = vadd.f32 0.0, %v1412
        %v1414 = vpop.f32.mrb[0].mxu0
        %1415 = vdwg.mxu0
        %v1416 = vmul.f32 %v1408, %v1327
        %v1417 = vmul.f32 %v1413, %v1328
        %s1418 = scalar_lea.vmem [#allocation10], 16
        %v1419 = vld [vmem:[%s1418] sm:$0xff]
        %v1421 = vsel %vm655, %v1416, 0
        %v1424 = vsel %vm655, %v1417, 0
        %1426 = vmatprep.subr.mxu0 0.0
        %1427 = vmatpush1.msra.mxu0 %v1419
        %1428 = vmatprep.subr.mxu0 0.0
        %1429 = vmatpush1.msra.mxu0 0.0
        %1430 = vmatprep.subr.mxu0 0.0
        %1431 = vmatpush1.msra.mxu0 0.0
        %1432 = vmatprep.subr.mxu0 0.0
        %1433 = vmatpush1.msra.mxu0 0.0
        %1434 = vmatprep.subr.mxu0 0.0
        %1435 = vmatpush1.msra.mxu0 0.0
        %1436 = vmatprep.subr.mxu0 0.0
        %1437 = vmatpush1.msra.mxu0 0.0
        %1438 = vmatprep.subr.mxu0 0.0
        %1439 = vmatpush1.msra.mxu0 0.0
        %1440 = vmatprep.subr.mxu0 0.0
        %1441 = vmatpush1.msra.mxu0 0.0
        %1442 = vmatprep.subr.mxu0 0.0
        %1443 = vmatpush1.msra.mxu0 0.0
        %1444 = vmatprep.subr.mxu0 0.0
        %1445 = vmatpush1.msra.mxu0 0.0
        %1446 = vmatprep.subr.mxu0 0.0
        %1447 = vmatpush1.msra.mxu0 0.0
        %1448 = vmatprep.subr.mxu0 0.0
        %1449 = vmatpush1.msra.mxu0 0.0
        %1450 = vmatprep.subr.mxu0 0.0
        %1451 = vmatpush1.msra.mxu0 0.0
        %1452 = vmatprep.subr.mxu0 0.0
        %1453 = vmatpush1.msra.mxu0 0.0
        %1454 = vmatprep.subr.mxu0 0.0
        %1455 = vmatpush1.msra.mxu0 0.0
        %1456 = vmatprep.subr.mxu0 0.0
        %1457 = vmatpush1.msra.mxu0 0.0
        %1458 = vmatprep.subr.mxu0 0.0
        %1459 = vmatpush1.msra.mxu0 0.0
        %1460 = vmatprep.subr.mxu0 0.0
        %1461 = vmatpush1.msra.mxu0 0.0
        %1462 = vmatprep.subr.mxu0 0.0
        %1463 = vmatpush1.msra.mxu0 0.0
        %1464 = vmatprep.subr.mxu0 0.0
        %1465 = vmatpush1.msra.mxu0 0.0
        %1466 = vmatprep.subr.mxu0 0.0
        %1467 = vmatpush1.msra.mxu0 0.0
        %1468 = vmatprep.subr.mxu0 0.0
        %1469 = vmatpush1.msra.mxu0 0.0
        %1470 = vmatprep.subr.mxu0 0.0
        %1471 = vmatpush1.msra.mxu0 0.0
        %1472 = vmatprep.subr.mxu0 0.0
        %1473 = vmatpush1.msra.mxu0 0.0
        %1474 = vmatprep.subr.mxu0 0.0
        %1475 = vmatpush1.msra.mxu0 0.0
        %1476 = vmatprep.subr.mxu0 0.0
        %1477 = vmatpush1.msra.mxu0 0.0
        %1478 = vmatprep.subr.mxu0 0.0
        %1479 = vmatpush1.msra.mxu0 0.0
        %1480 = vmatprep.subr.mxu0 0.0
        %1481 = vmatpush1.msra.mxu0 0.0
        %1482 = vmatprep.subr.mxu0 0.0
        %1483 = vmatpush1.msra.mxu0 0.0
        %1484 = vmatprep.subr.mxu0 0.0
        %1485 = vmatpush1.msra.mxu0 0.0
        %1486 = vmatprep.subr.mxu0 0.0
        %1487 = vmatpush1.msra.mxu0 0.0
        %1488 = vmatprep.subr.mxu0 0.0
        %1489 = vmatpush1.msra.mxu0 0.0
        %1490 = vmatprep.mubr.f32.mxu0 0.0
        %1491 = vmatmul.mubr.f32.gmra.mrb[0].mxu0 %v1421
        %v1492 = vpop.f32.mrb[0].mxu0
        %v1493 = vadd.f32 0.0, %v1492
        %v1494 = vpop.f32.mrb[0].mxu0
        %1495 = vmatprep.mubr.f32.mxu0 0.0
        %1496 = vmatmul.mubr.f32.gmra.mrb[0].mxu0 %v1424
        %v1497 = vpop.f32.mrb[0].mxu0
        %v1498 = vadd.f32 0.0, %v1497
        %v1499 = vpop.f32.mrb[0].mxu0
        %1500 = vdwg.mxu0
        %v1501 = vadd.f32 %v1210, %v1493
        %v1502 = vadd.f32 %v1215, %v1498
        %1503 = vrot.lane.b32.xlu0 %v653, 104
        %v1504 = vpop.permute.xlu0 %1503
        %1505 = vrot.lane.b32.xlu0 %v654, 104
        %v1506 = vpop.permute.xlu0 %1505
        %1507 = vrot.lane.b32.xlu0 %v645, 104
        %v1508 = vpop.permute.xlu0 %1507
        %1509 = vrot.lane.b32.xlu0 %v650, 104
        %v1510 = vpop.permute.xlu0 %1509
        %v1511 = vsel %vm655, %v1504, 0
        %v1513 = vsel %vm655, %v1506, 0
        %v1515 = vsel %vm655, %v1508, 0
        %v1517 = vsel %vm655, %v1510, 0
        %1519 = vmatprep.subr.mxu0 0.0
        %1520 = vmatpush1.xpose.msra.mxu0 %v1515
        %1521 = vmatprep.subr.mxu0 0.0
        %1522 = vmatpush1.xpose.msra.mxu0 %v1517
        %1523 = vmatprep.subr.mxu0 0.0
        %1524 = vmatpush1.xpose.msra.mxu0 0.0
        %1525 = vmatprep.subr.mxu0 0.0
        %1526 = vmatpush1.xpose.msra.mxu0 0.0
        %1527 = vmatprep.subr.mxu0 0.0
        %1528 = vmatpush1.xpose.msra.mxu0 0.0
        %1529 = vmatprep.subr.mxu0 0.0
        %1530 = vmatpush1.xpose.msra.mxu0 0.0
        %1531 = vmatprep.subr.mxu0 0.0
        %1532 = vmatpush1.xpose.msra.mxu0 0.0
        %1533 = vmatprep.subr.mxu0 0.0
        %1534 = vmatpush1.xpose.msra.mxu0 0.0
        %1535 = vmatprep.subr.mxu0 0.0
        %1536 = vmatpush1.xpose.msra.mxu0 0.0
        %1537 = vmatprep.subr.mxu0 0.0
        %1538 = vmatpush1.xpose.msra.mxu0 0.0
        %1539 = vmatprep.subr.mxu0 0.0
        %1540 = vmatpush1.xpose.msra.mxu0 0.0
        %1541 = vmatprep.subr.mxu0 0.0
        %1542 = vmatpush1.xpose.msra.mxu0 0.0
        %1543 = vmatprep.subr.mxu0 0.0
        %1544 = vmatpush1.xpose.msra.mxu0 0.0
        %1545 = vmatprep.subr.mxu0 0.0
        %1546 = vmatpush1.xpose.msra.mxu0 0.0
        %1547 = vmatprep.subr.mxu0 0.0
        %1548 = vmatpush1.xpose.msra.mxu0 0.0
        %1549 = vmatprep.subr.mxu0 0.0
        %1550 = vmatpush1.xpose.msra.mxu0 0.0
        %1551 = vmatprep.subr.mxu0 0.0
        %1552 = vmatpush1.xpose.msra.mxu0 0.0
        %1553 = vmatprep.subr.mxu0 0.0
        %1554 = vmatpush1.xpose.msra.mxu0 0.0
        %1555 = vmatprep.subr.mxu0 0.0
        %1556 = vmatpush1.xpose.msra.mxu0 0.0
        %1557 = vmatprep.subr.mxu0 0.0
        %1558 = vmatpush1.xpose.msra.mxu0 0.0
        %1559 = vmatprep.subr.mxu0 0.0
        %1560 = vmatpush1.xpose.msra.mxu0 0.0
        %1561 = vmatprep.subr.mxu0 0.0
        %1562 = vmatpush1.xpose.msra.mxu0 0.0
        %1563 = vmatprep.subr.mxu0 0.0
        %1564 = vmatpush1.xpose.msra.mxu0 0.0
        %1565 = vmatprep.subr.mxu0 0.0
        %1566 = vmatpush1.xpose.msra.mxu0 0.0
        %1567 = vmatprep.subr.mxu0 0.0
        %1568 = vmatpush1.xpose.msra.mxu0 0.0
        %1569 = vmatprep.subr.mxu0 0.0
        %1570 = vmatpush1.xpose.msra.mxu0 0.0
        %1571 = vmatprep.subr.mxu0 0.0
        %1572 = vmatpush1.xpose.msra.mxu0 0.0
        %1573 = vmatprep.subr.mxu0 0.0
        %1574 = vmatpush1.xpose.msra.mxu0 0.0
        %1575 = vmatprep.subr.mxu0 0.0
        %1576 = vmatpush1.xpose.msra.mxu0 0.0
        %1577 = vmatprep.subr.mxu0 0.0
        %1578 = vmatpush1.xpose.msra.mxu0 0.0
        %1579 = vmatprep.subr.mxu0 0.0
        %1580 = vmatpush1.xpose.msra.mxu0 0.0
        %1581 = vmatprep.subr.mxu0 0.0
        %1582 = vmatpush1.xpose.msra.mxu0 0.0
        %1583 = vmatprep.mubr.f32.mxu0 0.0
        %1584 = vmatmul.mubr.f32.gmra.mrb[0].mxu0 %v1511
        %v1585 = vpop.f32.mrb[0].mxu0
        %v1586 = vadd.f32 0.0, %v1585
        %v1587 = vpop.f32.mrb[0].mxu0
        %1588 = vmatprep.mubr.f32.mxu0 0.0
        %1589 = vmatmul.mubr.f32.gmra.mrb[0].mxu0 %v1513
        %v1590 = vpop.f32.mrb[0].mxu0
        %v1591 = vadd.f32 0.0, %v1590
        %v1592 = vpop.f32.mrb[0].mxu0
        %1593 = vdwg.mxu0
        %v1594 = vsel %vm743, %v1586, -inf
        %1595 = vmax.xlane.f32.xlu0 %v1594
        %v1596 = vpop.xlane.xlu0 %1595
        %v1597 = vsel %vm743, %v1591, -inf
        %1598 = vmax.xlane.f32.xlu0 %v1597
        %v1599 = vpop.xlane.xlu0 %1598
        %v1600 = vsub.f32 %v1586, %v1596
        %v1601 = vsub.f32 %v1591, %v1599
        %v1602 = vmul.f32 %v1600, 1.442695
        %v1603 = vpow.pop %v1602
        %v1604 = vmul.f32 %v1601, 1.442695
        %v1605 = vpow.pop %v1604
        %v1606 = vsel %vm743, %v1603, 0.0
        %1607 = vadd.xlane.f32.xlu0 %v1606
        %v1608 = vpop.xlane.xlu0 %1607
        %v1609 = vsel %vm743, %v1605, 0.0
        %1610 = vadd.xlane.f32.xlu0 %v1609
        %v1611 = vpop.xlane.xlu0 %1610
        %v1612 = vrcp.pop %v1608
        %v1613 = vrcp.pop %v1611
        %1614 = vrot.lane.b32.xlu0 %v645, 72
        %v1615 = vpop.permute.xlu0 %1614
        %1616 = vrot.lane.b32.xlu0 %v650, 72
        %v1617 = vpop.permute.xlu0 %1616
        %v1621 = vsel %vm743, %v1603, 0
        %v1624 = vsel %vm743, %v1605, 0
        %1626 = vmatprep.subr.mxu0 0.0
        %1627 = vmatpush1.msra.mxu0 %v1615
        %1628 = vmatprep.subr.mxu0 0.0
        %1629 = vmatpush1.msra.mxu0 %v1617
        %1630 = vmatprep.subr.mxu0 0.0
        %1631 = vmatpush1.msra.mxu0 0.0
        %1632 = vmatprep.subr.mxu0 0.0
        %1633 = vmatpush1.msra.mxu0 0.0
        %1634 = vmatprep.subr.mxu0 0.0
        %1635 = vmatpush1.msra.mxu0 0.0
        %1636 = vmatprep.subr.mxu0 0.0
        %1637 = vmatpush1.msra.mxu0 0.0
        %1638 = vmatprep.subr.mxu0 0.0
        %1639 = vmatpush1.msra.mxu0 0.0
        %1640 = vmatprep.subr.mxu0 0.0
        %1641 = vmatpush1.msra.mxu0 0.0
        %1642 = vmatprep.subr.mxu0 0.0
        %1643 = vmatpush1.msra.mxu0 0.0
        %1644 = vmatprep.subr.mxu0 0.0
        %1645 = vmatpush1.msra.mxu0 0.0
        %1646 = vmatprep.subr.mxu0 0.0
        %1647 = vmatpush1.msra.mxu0 0.0
        %1648 = vmatprep.subr.mxu0 0.0
        %1649 = vmatpush1.msra.mxu0 0.0
        %1650 = vmatprep.subr.mxu0 0.0
        %1651 = vmatpush1.msra.mxu0 0.0
        %1652 = vmatprep.subr.mxu0 0.0
        %1653 = vmatpush1.msra.mxu0 0.0
        %1654 = vmatprep.subr.mxu0 0.0
        %1655 = vmatpush1.msra.mxu0 0.0
        %1656 = vmatprep.subr.mxu0 0.0
        %1657 = vmatpush1.msra.mxu0 0.0
        %1658 = vmatprep.subr.mxu0 0.0
        %1659 = vmatpush1.msra.mxu0 0.0
        %1660 = vmatprep.subr.mxu0 0.0
        %1661 = vmatpush1.msra.mxu0 0.0
        %1662 = vmatprep.subr.mxu0 0.0
        %1663 = vmatpush1.msra.mxu0 0.0
        %1664 = vmatprep.subr.mxu0 0.0
        %1665 = vmatpush1.msra.mxu0 0.0
        %1666 = vmatprep.subr.mxu0 0.0
        %1667 = vmatpush1.msra.mxu0 0.0
        %1668 = vmatprep.subr.mxu0 0.0
        %1669 = vmatpush1.msra.mxu0 0.0
        %1670 = vmatprep.subr.mxu0 0.0
        %1671 = vmatpush1.msra.mxu0 0.0
        %1672 = vmatprep.subr.mxu0 0.0
        %1673 = vmatpush1.msra.mxu0 0.0
        %1674 = vmatprep.subr.mxu0 0.0
        %1675 = vmatpush1.msra.mxu0 0.0
        %1676 = vmatprep.subr.mxu0 0.0
        %1677 = vmatpush1.msra.mxu0 0.0
        %1678 = vmatprep.subr.mxu0 0.0
        %1679 = vmatpush1.msra.mxu0 0.0
        %1680 = vmatprep.subr.mxu0 0.0
        %1681 = vmatpush1.msra.mxu0 0.0
        %1682 = vmatprep.subr.mxu0 0.0
        %1683 = vmatpush1.msra.mxu0 0.0
        %1684 = vmatprep.subr.mxu0 0.0
        %1685 = vmatpush1.msra.mxu0 0.0
        %1686 = vmatprep.subr.mxu0 0.0
        %1687 = vmatpush1.msra.mxu0 0.0
        %1688 = vmatprep.subr.mxu0 0.0
        %1689 = vmatpush1.msra.mxu0 0.0
        %1690 = vmatprep.mubr.f32.mxu0 0.0
        %1691 = vmatmul.mubr.f32.gmra.mrb[0].mxu0 %v1621
        %v1692 = vpop.f32.mrb[0].mxu0
        %v1693 = vadd.f32 0.0, %v1692
        %v1694 = vpop.f32.mrb[0].mxu0
        %1695 = vmatprep.mubr.f32.mxu0 0.0
        %1696 = vmatmul.mubr.f32.gmra.mrb[0].mxu0 %v1624
        %v1697 = vpop.f32.mrb[0].mxu0
        %v1698 = vadd.f32 0.0, %v1697
        %v1699 = vpop.f32.mrb[0].mxu0
        %1700 = vdwg.mxu0
        %v1701 = vmul.f32 %v1693, %v1612
        %v1702 = vmul.f32 %v1698, %v1613
        %s1703 = scalar_lea.vmem [#allocation10], 24
        %v1704 = vld [vmem:[%s1703] sm:$0xff]
        %v1706 = vsel %vm655, %v1701, 0
        %v1709 = vsel %vm655, %v1702, 0
        %1711 = vmatprep.subr.mxu0 0.0
        %1712 = vmatpush1.msra.mxu0 %v1704
        %1713 = vmatprep.subr.mxu0 0.0
        %1714 = vmatpush1.msra.mxu0 0.0
        %1715 = vmatprep.subr.mxu0 0.0
        %1716 = vmatpush1.msra.mxu0 0.0
        %1717 = vmatprep.subr.mxu0 0.0
        %1718 = vmatpush1.msra.mxu0 0.0
        %1719 = vmatprep.subr.mxu0 0.0
        %1720 = vmatpush1.msra.mxu0 0.0
        %1721 = vmatprep.subr.mxu0 0.0
        %1722 = vmatpush1.msra.mxu0 0.0
        %1723 = vmatprep.subr.mxu0 0.0
        %1724 = vmatpush1.msra.mxu0 0.0
        %1725 = vmatprep.subr.mxu0 0.0
        %1726 = vmatpush1.msra.mxu0 0.0
        %1727 = vmatprep.subr.mxu0 0.0
        %1728 = vmatpush1.msra.mxu0 0.0
        %1729 = vmatprep.subr.mxu0 0.0
        %1730 = vmatpush1.msra.mxu0 0.0
        %1731 = vmatprep.subr.mxu0 0.0
        %1732 = vmatpush1.msra.mxu0 0.0
        %1733 = vmatprep.subr.mxu0 0.0
        %1734 = vmatpush1.msra.mxu0 0.0
        %1735 = vmatprep.subr.mxu0 0.0
        %1736 = vmatpush1.msra.mxu0 0.0
        %1737 = vmatprep.subr.mxu0 0.0
        %1738 = vmatpush1.msra.mxu0 0.0
        %1739 = vmatprep.subr.mxu0 0.0
        %1740 = vmatpush1.msra.mxu0 0.0
        %1741 = vmatprep.subr.mxu0 0.0
        %1742 = vmatpush1.msra.mxu0 0.0
        %1743 = vmatprep.subr.mxu0 0.0
        %1744 = vmatpush1.msra.mxu0 0.0
        %1745 = vmatprep.subr.mxu0 0.0
        %1746 = vmatpush1.msra.mxu0 0.0
        %1747 = vmatprep.subr.mxu0 0.0
        %1748 = vmatpush1.msra.mxu0 0.0
        %1749 = vmatprep.subr.mxu0 0.0
        %1750 = vmatpush1.msra.mxu0 0.0
        %1751 = vmatprep.subr.mxu0 0.0
        %1752 = vmatpush1.msra.mxu0 0.0
        %1753 = vmatprep.subr.mxu0 0.0
        %1754 = vmatpush1.msra.mxu0 0.0
        %1755 = vmatprep.subr.mxu0 0.0
        %1756 = vmatpush1.msra.mxu0 0.0
        %1757 = vmatprep.subr.mxu0 0.0
        %1758 = vmatpush1.msra.mxu0 0.0
        %1759 = vmatprep.subr.mxu0 0.0
        %1760 = vmatpush1.msra.mxu0 0.0
        %1761 = vmatprep.subr.mxu0 0.0
        %1762 = vmatpush1.msra.mxu0 0.0
        %1763 = vmatprep.subr.mxu0 0.0
        %1764 = vmatpush1.msra.mxu0 0.0
        %1765 = vmatprep.subr.mxu0 0.0
        %1766 = vmatpush1.msra.mxu0 0.0
        %1767 = vmatprep.subr.mxu0 0.0
        %1768 = vmatpush1.msra.mxu0 0.0
        %1769 = vmatprep.subr.mxu0 0.0
        %1770 = vmatpush1.msra.mxu0 0.0
        %1771 = vmatprep.subr.mxu0 0.0
        %1772 = vmatpush1.msra.mxu0 0.0
        %1773 = vmatprep.subr.mxu0 0.0
        %1774 = vmatpush1.msra.mxu0 0.0
        %1775 = vmatprep.mubr.f32.mxu0 0.0
        %1776 = vmatmul.mubr.f32.gmra.mrb[0].mxu0 %v1706
        %v1777 = vpop.f32.mrb[0].mxu0
        %v1778 = vadd.f32 0.0, %v1777
        %v1779 = vpop.f32.mrb[0].mxu0
        %1780 = vmatprep.mubr.f32.mxu0 0.0
        %1781 = vmatmul.mubr.f32.gmra.mrb[0].mxu0 %v1709
        %v1782 = vpop.f32.mrb[0].mxu0
        %v1783 = vadd.f32 0.0, %v1782
        %v1784 = vpop.f32.mrb[0].mxu0
        %1785 = vdwg.mxu0
        %v1786 = vadd.f32 %v1501, %v1778
        %v1787 = vadd.f32 %v1502, %v1783
        %v1788 = vadd.f32 %v464, %v1786
        %v1789 = vadd.f32 %v465, %v1787
        %v1790 = vld [vmem:[%s7] sm:$0x1]
        %v1792 = vlaneseq
        %v1793 = vshrl.u32 %v1792, 7
        %v1794 = vsub.s32 0, %v1793
        %v1795 = vrot.slane %v1790, %v1794
        %v1797 = vadd.f32 %v1788, %v1795
        %v1798 = vadd.f32 %v1789, %v1795
        %v1799 = vsel %vm479, %v1797, 0.0
        %1800 = vadd.xlane.f32.xlu0 %v1799
        %v1801 = vpop.xlane.xlu0 %1800
        %v1802 = vsel %vm479, %v1798, 0.0
        %1803 = vadd.xlane.f32.xlu0 %v1802
        %v1804 = vpop.xlane.xlu0 %1803
        %v1805 = vrcp.pop 32.0
        %v1806 = vmul.f32 %v1801, %v1805
        %v1807 = vmul.f32 %v1804, %v1805
        %v1808 = vsub.f32 %v1797, %v1806
        %v1809 = vsub.f32 %v1798, %v1807
        %v1810 = vmul.f32 %v1808, %v1808
        %v1811 = vmul.f32 %v1809, %v1809
        %v1812 = vsel %vm479, %v1810, 0.0
        %1813 = vadd.xlane.f32.xlu0 %v1812
        %v1814 = vpop.xlane.xlu0 %1813
        %v1815 = vsel %vm479, %v1811, 0.0
        %1816 = vadd.xlane.f32.xlu0 %v1815
        %v1817 = vpop.xlane.xlu0 %1816
        %v1818 = vmul.f32 %v1814, %v1805
        %v1819 = vmul.f32 %v1817, %v1805
        %v1820 = vadd.f32 %v1818, 1e-05
        %v1821 = vadd.f32 %v1819, 1e-05
        %v1822 = vrsqrt.pop %v1820
        %v1823 = vrsqrt.pop %v1821
        %v1824 = vmul.f32 %v1808, %v1822
        %v1825 = vmul.f32 %v1809, %v1823
        %v1826 = vld [vmem:[%s8] sm:$0x1]
        %v1828 = vlaneseq
        %v1829 = vshrl.u32 %v1828, 7
        %v1830 = vsub.s32 0, %v1829
        %v1831 = vrot.slane %v1826, %v1830
        %v1833 = vmul.f32 %v1824, %v1831
        %v1834 = vmul.f32 %v1825, %v1831
        %v1835 = vld [vmem:[%s9] sm:$0x1]
        %v1837 = vlaneseq
        %v1838 = vshrl.u32 %v1837, 7
        %v1839 = vsub.s32 0, %v1838
        %v1840 = vrot.slane %v1835, %v1839
        %v1842 = vadd.f32 %v1833, %v1840
        %v1843 = vadd.f32 %v1834, %v1840
        %1844 = vst.msk [vmem:[%s460] sm:$0xff] %vm479, %v1842
        %1845 = vst.msk [vmem:[%s460 + $0x8] sm:$0xff] %vm479, %v1843
        %s1846 = sand.u32 %s259, 1
        %s1847 = scalar_lea.sflag [#allocation4], %s1846
        %s1848 = sand.u32 %s259, 1
        %s1849 = smul.addr %s1848, 16
        %s1850 = scalar_lea.vmem [#allocation11], %s1849
        // Predicated region
        $region81: #{tpu_custom_call.1} parent=59 // pred_check
          %p1851 = pneg %p269
        $region82: #{tpu_custom_call.1} parent=59 // pred_check_branch
          %1853 = sbr.rel (%p1851) target = $region84
        $region83: #{tpu_custom_call.1} parent=59 // pred_region
          %s1854 = smul.u32 2, %s31
          %s1856 = ssub.s32 256, 256
          %1857 = vsyncadd %s1847, %s1856
          %s1858 = smul.addr %s1854, 128
          %s1859 = scalar_lea.hbm %s10, %s1858
          %s1860 = sshll.u32 %s1850, 4
          %s1861 = int_to_ptr.vmem [resolvable:$true] %s1860
          %1866 = dma.vmem_to_hbm [thread:$0]  %s1861, 256, %s1859, %s1847, 128, 128, 8
        $region84: #{tpu_custom_call.1} parent=59 // pred_fallthru
          _
      $region60: #{tpu_custom_call.1} parent=5 // pred_fallthru
        _
      %p1867 = scmp.le.s32.totalorder 2, %s26
      // Predicated region
      $region85: #{tpu_custom_call.1} parent=5 // pred_check
        %p1868 = pneg %p1867
      $region86: #{tpu_custom_call.1} parent=5 // pred_check_branch
        %1870 = sbr.rel (%p1868) target = $region88
      $region87: #{tpu_custom_call.1} parent=5 // pred_region
        %s1871 = ssub.s32 %s26, 2
        // Predicated region
        $region89: #{tpu_custom_call.1} parent=87 // pred_check
          %p1872 = pneg %p275
        $region90: #{tpu_custom_call.1} parent=87 // pred_check_branch
          %1874 = sbr.rel (%p1872) target = $region92
        $region91: #{tpu_custom_call.1} parent=87 // pred_region
          %s1875 = sand.u32 %s260, 1
          %s1876 = scalar_lea.sflag [#allocation4], %s1875
          %s1877 = sand.u32 %s260, 1
          %s1878 = smul.addr %s1877, 16
          %s1879 = scalar_lea.vmem [#allocation11], %s1878
          %1880 = dma.done %s1876, 256
        $region92: #{tpu_custom_call.1} parent=87 // pred_fallthru
          _
      $region88: #{tpu_custom_call.1} parent=5 // pred_fallthru
        _
    $region6: #{tpu_custom_call.1} parent=1 // loop_footer
      %s30 = sadd.s32 1, %s26
    $region7: #{tpu_custom_call.1} parent=1 // loop_footer_branch
      %25 = sbr.rel target = $region3
    $region8: #{tpu_custom_call.1} parent=1 // loop_exit
      _
    %1881 = vsyncpa [#allocation3], 1
    %s1882 = scalar_lea.sflag [#allocation3], 1
    %1883 = vsyncpa %s1882, 1
    %1884 = vsyncpa [#allocation6], 1
    %s1885 = scalar_lea.sflag [#allocation6], 1
    %1886 = vsyncpa %s1885, 1
    %1887 = vsyncpa [#allocation9], 1
    %1888 = vsyncpa [#allocation4], 1
    %s1889 = scalar_lea.sflag [#allocation4], 1
    %1890 = vsyncpa %s1889, 1

</llo_original>
